<compile_context>
chip_gen: v6e
topology: v6e:2x2x1
jax: 0.10.0
libtpu: 0.0.40
codegen_flags: <defaults>
</compile_context>

<pallas_src>
import functools

import jax
import jax.numpy as jnp
from jax.experimental import pallas as pl
from jax.experimental.pallas import tpu as pltpu

EPS = 1e-5          # nn.BatchNorm2d default eps
NEG_SLOPE = 0.01    # nn.LeakyReLU default negative_slope
LANES = 128
# Conservative caps: v7x has 64 MiB physical VMEM (32 MiB default scoped);
# v5e/v6e have 128 MiB.  Keep the fused-layer scratch well under the smallest.
VMEM_LIMIT = 32 * 1024 * 1024
FUSED_SCRATCH_CAP = 12 * 1024 * 1024   # resident y (f32) + out (bf16) budget

_VMEM = pl.BlockSpec(memory_space=pltpu.MemorySpace.VMEM)


def _round_up(x, m):
    return (x + m - 1) // m * m


def _pick_tile_m(m, target):
    """Largest divisor of m that is a multiple of 16 and <= target (else m)."""
    for t in range(min(target, m), 15, -1):
        if m % t == 0 and t % 16 == 0:
            return t
    return m


# ----------------------------- Pallas kernels ------------------------------

def _fused_conv_kernel(p_ref, w_ref, g_ref, bt_ref, o_ref,
                       y_ref, s_ref, q_ref, *, inv_count, tm):
    """Fused conv layer: per-step matmul into a resident VMEM y scratch plus
    running per-channel sum / sumsq; BN (batch stats, biased var) + LeakyReLU
    epilogue on the last grid step writes the bf16 output (resident block)."""
    i = pl.program_id(0)

    @pl.when(i == 0)
    def _():
        s_ref[...] = jnp.zeros_like(s_ref)
        q_ref[...] = jnp.zeros_like(q_ref)

    y = jnp.dot(p_ref[...], w_ref[...], preferred_element_type=jnp.float32)
    row0 = pl.multiple_of(i * tm, tm)
    y_ref[pl.ds(row0, tm), :] = y
    s_ref[...] += jnp.sum(y, axis=0, keepdims=True)
    q_ref[...] += jnp.sum(y * y, axis=0, keepdims=True)

    @pl.when(i == pl.num_programs(0) - 1)
    def _():
        mean = s_ref[...] * inv_count
        var = jnp.maximum(q_ref[...] * inv_count - mean * mean, 0.0)
        scale = g_ref[...] * jax.lax.rsqrt(var + EPS)    # f32 epilogue (v5e-safe)
        shift = bt_ref[...] - mean * scale
        z = y_ref[...] * scale + shift
        o_ref[...] = jnp.where(z > 0, z, NEG_SLOPE * z).astype(o_ref.dtype)


def _conv_stats_kernel(p_ref, w_ref, y_ref, s_ref, q_ref):
    """Fallback pass 1: matmul, bf16 intermediate, per-core partial stats."""
    @pl.when(pl.program_id(1) == 0)
    def _():
        s_ref[...] = jnp.zeros_like(s_ref)
        q_ref[...] = jnp.zeros_like(q_ref)

    y = jnp.dot(p_ref[...], w_ref[...], preferred_element_type=jnp.float32)
    y_ref[...] = y.astype(y_ref.dtype)          # bf16 store: half the HBM traffic
    s_ref[...] += jnp.sum(y, axis=0, keepdims=True)
    q_ref[...] += jnp.sum(y * y, axis=0, keepdims=True)


def _bn_lrelu_kernel(y_ref, s_ref, q_ref, g_ref, bt_ref, o_ref, *, inv_count):
    """Fallback pass 2: reduce per-core partials, BatchNorm + LeakyReLU."""
    mean = jnp.sum(s_ref[...], axis=0, keepdims=True) * inv_count
    ey2 = jnp.sum(q_ref[...], axis=0, keepdims=True) * inv_count
    var = jnp.maximum(ey2 - mean * mean, 0.0)
    scale = g_ref[...] * jax.lax.rsqrt(var + EPS)
    shift = bt_ref[...] - mean * scale
    z = y_ref[...].astype(jnp.float32) * scale + shift
    o_ref[...] = jnp.where(z > 0, z, NEG_SLOPE * z).astype(o_ref.dtype)


def _fc_kernel(x_ref, w_ref, b_ref, o_ref):
    """Fused fc_mu / fc_var heads: one matmul into 128 padded lanes."""
    o_ref[...] = (jnp.dot(x_ref[...], w_ref[...],
                          preferred_element_type=jnp.float32) + b_ref[...])


# ------------------------------- wrappers -----------------------------------

def conv_bn_lrelu(patches, w_km, gamma, beta):
    """patches: [M, K_pad] bf16, w_km: [K_pad, 128] bf16, gamma/beta: [1, 128].
    Returns [M, 128] bf16; pad lanes are exactly zero (gamma/beta padded with 0)."""
    m, k_pad = patches.shape
    cp = w_km.shape[1]
    # Keep the double-buffered patch tile <= ~4 MiB, otherwise go up to 1024 rows.
    target = max(16, min(1024, (2 << 20) // max(k_pad * 2, 1)))

    if m * cp * 6 <= FUSED_SCRATCH_CAP:
        # --------- fused single-pass path (y resident in VMEM) ----------
        tm = _pick_tile_m(m, target)
        return pl.pallas_call(
            functools.partial(_fused_conv_kernel,
                              inv_count=float(1.0 / m), tm=tm),
            out_shape=jax.ShapeDtypeStruct((m, cp), jnp.bfloat16),
            grid=(m // tm,),
            in_specs=[pl.BlockSpec((tm, k_pad), lambda i: (i, 0)),
                      pl.BlockSpec((k_pad, cp), lambda i: (0, 0)),   # resident weight
                      pl.BlockSpec((1, cp), lambda i: (0, 0)),
                      pl.BlockSpec((1, cp), lambda i: (0, 0))],
            out_specs=pl.BlockSpec((m, cp), lambda i: (0, 0)),       # resident output
            scratch_shapes=[pltpu.VMEM((m, cp), jnp.float32),        # pre-BN y
                            pltpu.VMEM((1, cp), jnp.float32),        # sum
                            pltpu.VMEM((1, cp), jnp.float32)],       # sumsq
            compiler_params=pltpu.CompilerParams(
                dimension_semantics=("arbitrary",),                  # stats over M
                vmem_limit_bytes=VMEM_LIMIT),
        )(patches, w_km, gamma, beta)

    # --------- two-pass fallback for large M (bf16 intermediate) ----------
    ncores = 2 if m % 2 == 0 else 1        # split for v7x's 2 TensorCores
    mh = m // ncores
    tm = _pick_tile_m(mh, target)
    bpc = mh // tm                         # blocks per core

    y, ysum, ysq = pl.pallas_call(
        _conv_stats_kernel,
        out_shape=(jax.ShapeDtypeStruct((m, cp), jnp.bfloat16),
                   jax.ShapeDtypeStruct((ncores, cp), jnp.float32),
                   jax.ShapeDtypeStruct((ncores, cp), jnp.float32)),
        grid=(ncores, bpc),
        in_specs=[pl.BlockSpec((tm, k_pad), lambda c, i: (c * bpc + i, 0)),
                  pl.BlockSpec((k_pad, cp), lambda c, i: (0, 0))],
        out_specs=(pl.BlockSpec((tm, cp), lambda c, i: (c * bpc + i, 0)),
                   pl.BlockSpec((1, cp), lambda c, i: (c, 0)),       # per-core partial
                   pl.BlockSpec((1, cp), lambda c, i: (c, 0))),
        compiler_params=pltpu.CompilerParams(
            dimension_semantics=("parallel", "arbitrary"),
            vmem_limit_bytes=VMEM_LIMIT),
    )(patches, w_km)

    return pl.pallas_call(
        functools.partial(_bn_lrelu_kernel, inv_count=float(1.0 / m)),
        out_shape=jax.ShapeDtypeStruct((m, cp), jnp.bfloat16),
        grid=(m // tm,),
        in_specs=[pl.BlockSpec((tm, cp), lambda i: (i, 0)),
                  pl.BlockSpec((ncores, cp), lambda i: (0, 0)),
                  pl.BlockSpec((ncores, cp), lambda i: (0, 0)),
                  pl.BlockSpec((1, cp), lambda i: (0, 0)),
                  pl.BlockSpec((1, cp), lambda i: (0, 0))],
        out_specs=pl.BlockSpec((tm, cp), lambda i: (i, 0)),
        compiler_params=pltpu.CompilerParams(
            dimension_semantics=("parallel",),
            vmem_limit_bytes=VMEM_LIMIT),
    )(y, ysum, ysq, gamma, beta)


def fc_heads(feat, w, b):
    """feat: [N, flat_pad] bf16, w: [flat_pad, 128] bf16 (mu|var fused)."""
    n = feat.shape[0]
    cp = w.shape[1]
    return pl.pallas_call(
        _fc_kernel,
        out_shape=jax.ShapeDtypeStruct((n, cp), jnp.float32),
        in_specs=[_VMEM, _VMEM, _VMEM],
        out_specs=_VMEM,
        compiler_params=pltpu.CompilerParams(vmem_limit_bytes=VMEM_LIMIT),
    )(feat, w, b)


def _im2col_s2_p1(x_nhwc, k_pad):
    """im2col for kernel=3, stride=2, pad=1.  Column order (kh, kw, c_in)."""
    n, h, w, c = x_nhwc.shape
    ho = (h - 1) // 2 + 1
    wo = (w - 1) // 2 + 1
    xp = jnp.pad(x_nhwc, ((0, 0), (1, 1), (1, 1), (0, 0)))
    cols = [xp[:, kh:kh + 2 * (ho - 1) + 1:2, kw:kw + 2 * (wo - 1) + 1:2, :]
            for kh in range(3) for kw in range(3)]
    patches = jnp.concatenate(cols, axis=-1)            # [N, Ho, Wo, 9*C]
    k = 9 * c
    if k_pad > k:
        patches = jnp.pad(patches, ((0, 0), (0, 0), (0, 0), (0, k_pad - k)))
    return patches.reshape(n * ho * wo, k_pad), ho, wo


def encoder_forward(x_nchw, prep):
    """Mirrors Encoder.forward: conv stack -> flatten -> (mu, log_var)."""
    x = jnp.transpose(x_nchw, (0, 2, 3, 1)).astype(jnp.bfloat16)  # NCHW -> NHWC
    n = x.shape[0]
    n_layers = len(prep["convs"])
    out = None
    for li, layer in enumerate(prep["convs"]):
        patches, ho, wo = _im2col_s2_p1(x, layer["k_pad"])
        out = conv_bn_lrelu(patches, layer["w"], layer["gamma"], layer["beta"])
        if li + 1 < n_layers:
            x = out[:, :layer["c_out"]].reshape(n, ho, wo, layer["c_out"])
    # Padded-NHWC flatten: fc weight rows were pre-permuted / zero-padded to
    # this order, so no channel-slice copy is needed before the FC heads.
    feat = out.reshape(n, -1)
    out_fc = fc_heads(feat, prep["fc_w"], prep["fc_b"])
    latent = prep["latent_dim"]
    return [out_fc[:, :latent], out_fc[:, latent:2 * latent]]


# --------------------------- parameter construction --------------------------

def init_params(key, in_channels, conv_out_channels, latent_dim, spatial):
    """Raw PyTorch-layout parameters (Conv/BN per layer + two FC heads)."""
    params = {"convs": []}
    c_in = in_channels
    h = spatial
    for c_out in conv_out_channels:
        key, k1, k2, k3, k4 = jax.random.split(key, 5)
        w = 0.1 * jax.random.normal(k1, (c_out, c_in, 3, 3), jnp.float32)
        b = 0.1 * jax.random.normal(k2, (c_out,), jnp.float32)
        gamma = 1.0 + 0.1 * jax.random.normal(k3, (c_out,), jnp.float32)
        beta = 0.1 * jax.random.normal(k4, (c_out,), jnp.float32)
        params["convs"].append((w, b, gamma, beta))
        c_in = c_out
        h = (h + 2 - 3) // 2 + 1        # conv k=3, s=2, p=1 output size
    # FC in-dim derived from conv output-size arithmetic (stand-in for the
    # torchinfo summary in the original module) for the chosen input size.
    flat = conv_out_channels[-1] * h * h
    key, k1, k2, k3, k4 = jax.random.split(key, 5)
    params["w_mu"] = 0.05 * jax.random.normal(k1, (latent_dim, flat), jnp.float32)
    params["b_mu"] = 0.05 * jax.random.normal(k2, (latent_dim,), jnp.float32)
    params["w_var"] = 0.05 * jax.random.normal(k3, (latent_dim, flat), jnp.float32)
    params["b_var"] = 0.05 * jax.random.normal(k4, (latent_dim,), jnp.float32)
    return params


def prepare_params(raw, in_channels, spatial):
    """Hoisted, one-time weight prep: padding, bf16 cast, FC fusion/permute."""
    prep = {"convs": []}
    c_in = in_channels
    h = w_sp = spatial
    for (w, b, gamma, beta) in raw["convs"]:
        del b   # conv bias cancels exactly in BatchNorm's (y - mean); beta shifts.
        c_out = w.shape[0]
        assert c_out <= LANES, "channel tiling beyond 128 lanes not implemented"
        k = 9 * c_in
        k_pad = _round_up(k, 32)
        # [C_out, C_in, kH, kW] -> [(kh, kw, c_in), C_out] -> pad -> bf16
        w_km = jnp.transpose(w, (2, 3, 1, 0)).reshape(k, c_out)
        w_km = jnp.pad(w_km, ((0, k_pad - k), (0, LANES - c_out)))
        pad_c = ((0, 0), (0, LANES - c_out))
        prep["convs"].append(dict(
            w=w_km.astype(jnp.bfloat16),
            gamma=jnp.pad(gamma.reshape(1, -1), pad_c),   # zero gamma/beta on pad
            beta=jnp.pad(beta.reshape(1, -1), pad_c),     # lanes -> pad output == 0
            c_out=c_out, k_pad=k_pad))
        c_in = c_out
        h = (h + 2 - 3) // 2 + 1
        w_sp = (w_sp + 2 - 3) // 2 + 1

    # Fuse fc_mu / fc_var into one weight: rows permuted from NCHW-flatten
    # order (PyTorch) to our padded-NHWC-flatten order (128 lanes per pixel),
    # with zero rows at the padded channel positions.
    latent = raw["w_mu"].shape[0]
    flat = raw["w_mu"].shape[1]
    assert flat == c_in * h * w_sp

    def permute_pad(wm):
        w4 = jnp.transpose(wm.reshape(latent, c_in, h, w_sp), (0, 2, 3, 1))
        w4 = jnp.pad(w4, ((0, 0), (0, 0), (0, 0), (0, LANES - c_in)))
        return w4.reshape(latent, h * w_sp * LANES)

    w_fused = jnp.concatenate([permute_pad(raw["w_mu"]),
                               permute_pad(raw["w_var"])], axis=0)   # [2L, flat_pad]
    w_fused = jnp.transpose(w_fused)                                 # [flat_pad, 2L]
    cp = _round_up(2 * latent, LANES)
    prep["fc_w"] = jnp.pad(w_fused, ((0, 0), (0, cp - 2 * latent))).astype(jnp.bfloat16)
    b_fused = jnp.concatenate([raw["b_mu"], raw["b_var"]]).reshape(1, -1)
    prep["fc_b"] = jnp.pad(b_fused, ((0, 0), (0, cp - 2 * latent)))
    prep["latent_dim"] = latent
    return prep


# ----------------------------------- main ------------------------------------

if __name__ == "__main__":
    key = jax.random.PRNGKey(0)
    in_channels = 3
    conv_out_channels = [8, 16]
    latent_dim = 16
    N, H = 2, 32

    key, kx = jax.random.split(key)
    x = jax.random.normal(kx, (N, in_channels, H, H), jnp.float32)

    raw_params = init_params(key, in_channels, conv_out_channels, latent_dim, H)
    prep = prepare_params(raw_params, in_channels, H)

    mu, log_var = encoder_forward(x, prep)
    jax.block_until_ready((mu, log_var))
    assert mu.shape == (N, latent_dim) and log_var.shape == (N, latent_dim)
    assert bool(jnp.all(jnp.isfinite(mu))) and bool(jnp.all(jnp.isfinite(log_var)))
    print("KERNEL_OK")
</pallas_src>

<mosaic_0001>
module attributes {stable_mosaic.version = 11 : i64} {
  func.func @_fused_conv_kernel(%arg0: i32, %arg1: memref<512x32xbf16, #tpu.memory_space<vmem>>, %arg2: memref<32x128xbf16, #tpu.memory_space<vmem>>, %arg3: memref<1x128xf32, #tpu.memory_space<vmem>>, %arg4: memref<1x128xf32, #tpu.memory_space<vmem>>, %arg5: memref<512x128xbf16, #tpu.memory_space<vmem>>, %arg6: memref<512x128xf32, #tpu.memory_space<vmem>>, %arg7: memref<1x128xf32, #tpu.memory_space<vmem>>, %arg8: memref<1x128xf32, #tpu.memory_space<vmem>>) attributes {dimension_semantics = [#tpu.dimension_semantics<arbitrary>], iteration_bounds = array<i64: 1>, scalar_prefetch = 0 : i64, scratch_operands = 3 : i64, tpu.core_type = #tpu.core_type<tc>, window_params = [{transform_indices = @transform_0, window_bounds = array<i64: 512, 32>}, {pipeline_mode = #tpu.pipeline_mode<synchronous>, transform_indices = @transform_1, window_bounds = array<i64: 32, 128>}, {pipeline_mode = #tpu.pipeline_mode<synchronous>, transform_indices = @transform_2, window_bounds = array<i64: 1, 128>}, {pipeline_mode = #tpu.pipeline_mode<synchronous>, transform_indices = @transform_3, window_bounds = array<i64: 1, 128>}, {pipeline_mode = #tpu.pipeline_mode<synchronous>, transform_indices = @transform_4, window_bounds = array<i64: 512, 128>}]} {
    %c0_i32 = arith.constant 0 : i32
    %0 = arith.cmpi eq, %arg0, %c0_i32 : i32
    %1 = arith.extui %0 : i1 to i32
    %c0_i32_0 = arith.constant 0 : i32
    %2 = arith.cmpi ne, %1, %c0_i32_0 : i32
    scf.if %2 {
      %cst_17 = arith.constant 0.000000e+00 : f32
      %24 = vector.broadcast %cst_17 : f32 to vector<1x128xf32>
      %c0_18 = arith.constant 0 : index
      %c0_19 = arith.constant 0 : index
      %25 = vector.load %arg7[%c0_18, %c0_19] : memref<1x128xf32, #tpu.memory_space<vmem>>, vector<1x128xf32>
      tpu.vector_store %arg7[%c0_18, %c0_19], %24 {strides = array<i32>} : memref<1x128xf32, #tpu.memory_space<vmem>>, vector<1x128xf32>,
      %cst_20 = arith.constant 0.000000e+00 : f32
      %26 = vector.broadcast %cst_20 : f32 to vector<1x128xf32>
      %c0_21 = arith.constant 0 : index
      %c0_22 = arith.constant 0 : index
      %27 = vector.load %arg8[%c0_21, %c0_22] : memref<1x128xf32, #tpu.memory_space<vmem>>, vector<1x128xf32>
      tpu.vector_store %arg8[%c0_21, %c0_22], %26 {strides = array<i32>} : memref<1x128xf32, #tpu.memory_space<vmem>>, vector<1x128xf32>,
    } else {
    }
    %c0 = arith.constant 0 : index
    %c0_1 = arith.constant 0 : index
    %3 = vector.load %arg1[%c0, %c0_1] : memref<512x32xbf16, #tpu.memory_space<vmem>>, vector<512x32xbf16>
    %c0_2 = arith.constant 0 : index
    %c0_3 = arith.constant 0 : index
    %4 = vector.load %arg2[%c0_2, %c0_3] : memref<32x128xbf16, #tpu.memory_space<vmem>>, vector<32x128xbf16>
    %cst = arith.constant dense<0.000000e+00> : vector<512x128xf32>
    %5 = tpu.matmul %3, %4, %cst {dimension_numbers = #tpu.dot_dimension_numbers<[1], [0], [0], [1], [0, 0, 1, 1], [], []>} : vector<512x32xbf16>, vector<32x128xbf16>, vector<512x128xf32> -> vector<512x128xf32>
    %c512_i32 = arith.constant 512 : i32
    %6 = arith.muli %arg0, %c512_i32 : i32
    %7 = tpu.assume_multiple %6, 512 : i32
    %8 = arith.index_cast %7 : i32 to index
    %c0_4 = arith.constant 0 : index
    %9 = vector.load %arg6[%8, %c0_4] : memref<512x128xf32, #tpu.memory_space<vmem>>, vector<512x128xf32>
    tpu.vector_store %arg6[%8, %c0_4], %5 {strides = array<i32>} : memref<512x128xf32, #tpu.memory_space<vmem>>, vector<512x128xf32>,
    %c0_5 = arith.constant 0 : index
    %c0_6 = arith.constant 0 : index
    %10 = vector.load %arg7[%c0_5, %c0_6] : memref<1x128xf32, #tpu.memory_space<vmem>>, vector<1x128xf32>
    %cst_7 = arith.constant dense<0.000000e+00> : vector<128xf32>
    %11 = vector.multi_reduction <add>, %5, %cst_7 [0] : vector<512x128xf32> to vector<128xf32>
    %12 = vector.shape_cast %11 : vector<128xf32> to vector<1x128xf32>
    %13 = arith.addf %10, %12 : vector<1x128xf32>
    %c0_8 = arith.constant 0 : index
    %c0_9 = arith.constant 0 : index
    %14 = vector.load %arg7[%c0_8, %c0_9] : memref<1x128xf32, #tpu.memory_space<vmem>>, vector<1x128xf32>
    tpu.vector_store %arg7[%c0_8, %c0_9], %13 {strides = array<i32>} : memref<1x128xf32, #tpu.memory_space<vmem>>, vector<1x128xf32>,
    %c0_10 = arith.constant 0 : index
    %c0_11 = arith.constant 0 : index
    %15 = vector.load %arg8[%c0_10, %c0_11] : memref<1x128xf32, #tpu.memory_space<vmem>>, vector<1x128xf32>
    %16 = arith.mulf %5, %5 : vector<512x128xf32>
    %cst_12 = arith.constant dense<0.000000e+00> : vector<128xf32>
    %17 = vector.multi_reduction <add>, %16, %cst_12 [0] : vector<512x128xf32> to vector<128xf32>
    %18 = vector.shape_cast %17 : vector<128xf32> to vector<1x128xf32>
    %19 = arith.addf %15, %18 : vector<1x128xf32>
    %c0_13 = arith.constant 0 : index
    %c0_14 = arith.constant 0 : index
    %20 = vector.load %arg8[%c0_13, %c0_14] : memref<1x128xf32, #tpu.memory_space<vmem>>, vector<1x128xf32>
    tpu.vector_store %arg8[%c0_13, %c0_14], %19 {strides = array<i32>} : memref<1x128xf32, #tpu.memory_space<vmem>>, vector<1x128xf32>,
    %c0_i32_15 = arith.constant 0 : i32
    %21 = arith.cmpi eq, %arg0, %c0_i32_15 : i32
    %22 = arith.extui %21 : i1 to i32
    %c0_i32_16 = arith.constant 0 : i32
    %23 = arith.cmpi ne, %22, %c0_i32_16 : i32
    scf.if %23 {
      %c0_17 = arith.constant 0 : index
      %c0_18 = arith.constant 0 : index
      %24 = vector.load %arg7[%c0_17, %c0_18] : memref<1x128xf32, #tpu.memory_space<vmem>>, vector<1x128xf32>
      %cst_19 = arith.constant 0.001953125 : f32
      %25 = vector.broadcast %cst_19 : f32 to vector<1x128xf32>
      %26 = arith.mulf %24, %25 : vector<1x128xf32>
      %c0_20 = arith.constant 0 : index
      %c0_21 = arith.constant 0 : index
      %27 = vector.load %arg8[%c0_20, %c0_21] : memref<1x128xf32, #tpu.memory_space<vmem>>, vector<1x128xf32>
      %cst_22 = arith.constant 0.001953125 : f32
      %28 = vector.broadcast %cst_22 : f32 to vector<1x128xf32>
      %29 = arith.mulf %27, %28 : vector<1x128xf32>
      %30 = arith.mulf %26, %26 : vector<1x128xf32>
      %31 = arith.subf %29, %30 : vector<1x128xf32>
      %cst_23 = arith.constant 0.000000e+00 : f32
      %32 = vector.broadcast %cst_23 : f32 to vector<1x128xf32>
      %33 = arith.maximumf %31, %32 : vector<1x128xf32>
      %c0_24 = arith.constant 0 : index
      %c0_25 = arith.constant 0 : index
      %34 = vector.load %arg3[%c0_24, %c0_25] : memref<1x128xf32, #tpu.memory_space<vmem>>, vector<1x128xf32>
      %cst_26 = arith.constant 9.99999974E-6 : f32
      %35 = vector.broadcast %cst_26 : f32 to vector<1x128xf32>
      %36 = arith.addf %33, %35 : vector<1x128xf32>
      %37 = math.rsqrt %36 : vector<1x128xf32>
      %38 = arith.mulf %34, %37 : vector<1x128xf32>
      %c0_27 = arith.constant 0 : index
      %c0_28 = arith.constant 0 : index
      %39 = vector.load %arg4[%c0_27, %c0_28] : memref<1x128xf32, #tpu.memory_space<vmem>>, vector<1x128xf32>
      %40 = arith.mulf %26, %38 : vector<1x128xf32>
      %41 = arith.subf %39, %40 : vector<1x128xf32>
      %c0_29 = arith.constant 0 : index
      %c0_30 = arith.constant 0 : index
      %42 = vector.load %arg6[%c0_29, %c0_30] : memref<512x128xf32, #tpu.memory_space<vmem>>, vector<512x128xf32>
      %43 = vector.broadcast %38 : vector<1x128xf32> to vector<512x128xf32>
      %44 = arith.mulf %42, %43 : vector<512x128xf32>
      %45 = vector.broadcast %41 : vector<1x128xf32> to vector<512x128xf32>
      %46 = arith.addf %44, %45 : vector<512x128xf32>
      %cst_31 = arith.constant 0.000000e+00 : f32
      %47 = vector.broadcast %cst_31 : f32 to vector<512x128xf32>
      %48 = arith.cmpf ogt, %46, %47 : vector<512x128xf32>
      %cst_32 = arith.constant 0.00999999977 : f32
      %49 = vector.broadcast %cst_32 : f32 to vector<512x128xf32>
      %50 = arith.mulf %49, %46 : vector<512x128xf32>
      %51 = arith.select %48, %46, %50 : vector<512x128xi1>, vector<512x128xf32>
      %52 = arith.truncf %51 : vector<512x128xf32> to vector<512x128xbf16>
      %c0_33 = arith.constant 0 : index
      %c0_34 = arith.constant 0 : index
      %53 = vector.load %arg5[%c0_33, %c0_34] : memref<512x128xbf16, #tpu.memory_space<vmem>>, vector<512x128xbf16>
      tpu.vector_store %arg5[%c0_33, %c0_34], %52 {strides = array<i32>} : memref<512x128xbf16, #tpu.memory_space<vmem>>, vector<512x128xbf16>,
    } else {
    }
    return
  }
  func.func @transform_0(%arg0: i32) -> (i32, i32) {
    %c0_i32 = arith.constant 0 : i32
    %c0_i32_0 = arith.constant 0 : i32
    return %arg0, %c0_i32 : i32, i32
  }
  func.func @transform_1(%arg0: i32) -> (i32, i32) {
    %c0_i32 = arith.constant 0 : i32
    %c0_i32_0 = arith.constant 0 : i32
    %c0_i32_1 = arith.constant 0 : i32
    return %c0_i32, %c0_i32_0 : i32, i32
  }
  func.func @transform_2(%arg0: i32) -> (i32, i32) {
    %c0_i32 = arith.constant 0 : i32
    %c0_i32_0 = arith.constant 0 : i32
    %c0_i32_1 = arith.constant 0 : i32
    return %c0_i32, %c0_i32_0 : i32, i32
  }
  func.func @transform_3(%arg0: i32) -> (i32, i32) {
    %c0_i32 = arith.constant 0 : i32
    %c0_i32_0 = arith.constant 0 : i32
    %c0_i32_1 = arith.constant 0 : i32
    return %c0_i32, %c0_i32_0 : i32, i32
  }
  func.func @transform_4(%arg0: i32) -> (i32, i32) {
    %c0_i32 = arith.constant 0 : i32
    %c0_i32_0 = arith.constant 0 : i32
    %c0_i32_1 = arith.constant 0 : i32
    return %c0_i32, %c0_i32_0 : i32, i32
  }
}

</mosaic_0001>

<llo_original>
// kernel: tpu_custom_call.1
$region0: #{tpu_custom_call.1}
  #allocation0 [shape = 'u32[]', space=smem, size = 0x4, offset = 0x4, fixed_abs, tag = 'smem constant byte address 0x4 - core index']
  #allocation1 [shape = 'u32[144,128]{1,0:T(1,128)}', space=vmem, size = 0x12000, scoped, tag = 'internal scratch']
  #allocation2 [shape = 'f32[512,128]{1,0:T(8,128)}', space=vmem, size = 0x40000, scoped, tag = 'scratch operand']
  #allocation3 [shape = 'f32[1,128]{1,0:T(1,128)}', space=vmem, size = 0x200, scoped, tag = 'scratch operand']
  #allocation4 [shape = 'f32[1,128]{1,0:T(1,128)}', space=vmem, size = 0x200, scoped, tag = 'scratch operand']
  %s0 = inlined_call_operand.vmem [shape: bf16[512,32], index: 0, kind: input, shape index: {}]
  %s1 = inlined_call_operand.vmem [shape: bf16[32,128], index: 1, kind: input, shape index: {}]
  %s2 = inlined_call_operand.vmem [shape: f32[1,128], index: 2, kind: input, shape index: {}]
  %s3 = inlined_call_operand.vmem [shape: f32[1,128], index: 3, kind: input, shape index: {}]
  %s4 = inlined_call_operand.hbm [shape: bf16[512,128], index: 4, kind: output, shape index: {}]
  %s5 = sld [smem:[#allocation0]]
  $region34: #{tpu_custom_call.1} parent=0
    _
  %s7 = ssub.s32 1, %s5
  %s8 = scalar_select 0, %s7, %s5
  $region1: #{tpu_custom_call.1} parent=0
    #allocation5 [shape = 'u8[131072]{0}', space=vmem, size = 0x20000, scoped, tag = 'output window, operand 0, single buffered']
    #allocation6 [shape = 's32[1]{0}', space=sflag, size = 0x4, scoped, tag = 'scoped memory for tpu_custom_call.1']
    %9 = vsyncpa [#allocation6], 0
    // Predicated region
    $region2: #{tpu_custom_call.1} parent=1 // pred_check
      _
    $region3: #{tpu_custom_call.1} parent=1 // pred_check_branch
      %11 = sbr.rel (0) target = $region5
    $region4: #{tpu_custom_call.1} parent=1 // pred_region
      _
    $region5: #{tpu_custom_call.1} parent=1 // pred_fallthru
      _
    // Predicated region
    $region6: #{tpu_custom_call.1} parent=1 // pred_check
      _
    $region7: #{tpu_custom_call.1} parent=1 // pred_check_branch
      %13 = sbr.rel (0) target = $region9
    $region8: #{tpu_custom_call.1} parent=1 // pred_region
      _
    $region9: #{tpu_custom_call.1} parent=1 // pred_fallthru
      _
    // Predicated region
    $region10: #{tpu_custom_call.1} parent=1 // pred_check
      _
    $region11: #{tpu_custom_call.1} parent=1 // pred_check_branch
      %15 = sbr.rel (0) target = $region13
    $region12: #{tpu_custom_call.1} parent=1 // pred_region
      _
    $region13: #{tpu_custom_call.1} parent=1 // pred_fallthru
      _
    // Predicated region
    $region14: #{tpu_custom_call.1} parent=1 // pred_check
      _
    $region15: #{tpu_custom_call.1} parent=1 // pred_check_branch
      %17 = sbr.rel (0) target = $region17
    $region16: #{tpu_custom_call.1} parent=1 // pred_region
      _
    $region17: #{tpu_custom_call.1} parent=1 // pred_fallthru
      _
    %p19 = scmp.eq.s32.totalorder 0, 0
    // Predicated region
    $region18: #{tpu_custom_call.1} parent=1 // pred_check
      %p20 = pneg %p19
    $region19: #{tpu_custom_call.1} parent=1 // pred_check_branch
      %22 = sbr.rel (%p20) target = $region21
    $region20: #{tpu_custom_call.1} parent=1 // pred_region
      %23 = vst [vmem:[#allocation3] sm:$0x1] 0.0
      %24 = vst [vmem:[#allocation4] sm:$0x1] 0.0
    $region21: #{tpu_custom_call.1} parent=1 // pred_fallthru
      _
    %v25 = vld [vmem:[%s0] sm:$0xf]
    %v26 = vld [vmem:[%s0 + $0x4] sm:$0xf]
    %v27 = vld [vmem:[%s0 + $0x8] sm:$0xf]
    %v28 = vld [vmem:[%s0 + $0xc] sm:$0xf]
    %v29 = vld [vmem:[%s0 + $0x10] sm:$0xf]
    %v30 = vld [vmem:[%s0 + $0x14] sm:$0xf]
    %v31 = vld [vmem:[%s0 + $0x18] sm:$0xf]
    %v32 = vld [vmem:[%s0 + $0x1c] sm:$0xf]
    %v33 = vld [vmem:[%s0 + $0x20] sm:$0xf]
    %v34 = vld [vmem:[%s0 + $0x24] sm:$0xf]
    %v35 = vld [vmem:[%s0 + $0x28] sm:$0xf]
    %v36 = vld [vmem:[%s0 + $0x2c] sm:$0xf]
    %v37 = vld [vmem:[%s0 + $0x30] sm:$0xf]
    %v38 = vld [vmem:[%s0 + $0x34] sm:$0xf]
    %v39 = vld [vmem:[%s0 + $0x38] sm:$0xf]
    %v40 = vld [vmem:[%s0 + $0x3c] sm:$0xf]
    %v41 = vld [vmem:[%s0 + $0x40] sm:$0xf]
    %v42 = vld [vmem:[%s0 + $0x44] sm:$0xf]
    %v43 = vld [vmem:[%s0 + $0x48] sm:$0xf]
    %v44 = vld [vmem:[%s0 + $0x4c] sm:$0xf]
    %v45 = vld [vmem:[%s0 + $0x50] sm:$0xf]
    %v46 = vld [vmem:[%s0 + $0x54] sm:$0xf]
    %v47 = vld [vmem:[%s0 + $0x58] sm:$0xf]
    %v48 = vld [vmem:[%s0 + $0x5c] sm:$0xf]
    %v49 = vld [vmem:[%s0 + $0x60] sm:$0xf]
    %v50 = vld [vmem:[%s0 + $0x64] sm:$0xf]
    %v51 = vld [vmem:[%s0 + $0x68] sm:$0xf]
    %v52 = vld [vmem:[%s0 + $0x6c] sm:$0xf]
    %v53 = vld [vmem:[%s0 + $0x70] sm:$0xf]
    %v54 = vld [vmem:[%s0 + $0x74] sm:$0xf]
    %v55 = vld [vmem:[%s0 + $0x78] sm:$0xf]
    %v56 = vld [vmem:[%s0 + $0x7c] sm:$0xf]
    %v57 = vld [vmem:[%s0 + $0x80] sm:$0xf]
    %v58 = vld [vmem:[%s0 + $0x84] sm:$0xf]
    %v59 = vld [vmem:[%s0 + $0x88] sm:$0xf]
    %v60 = vld [vmem:[%s0 + $0x8c] sm:$0xf]
    %v61 = vld [vmem:[%s0 + $0x90] sm:$0xf]
    %v62 = vld [vmem:[%s0 + $0x94] sm:$0xf]
    %v63 = vld [vmem:[%s0 + $0x98] sm:$0xf]
    %v64 = vld [vmem:[%s0 + $0x9c] sm:$0xf]
    %v65 = vld [vmem:[%s0 + $0xa0] sm:$0xf]
    %v66 = vld [vmem:[%s0 + $0xa4] sm:$0xf]
    %v67 = vld [vmem:[%s0 + $0xa8] sm:$0xf]
    %v68 = vld [vmem:[%s0 + $0xac] sm:$0xf]
    %v69 = vld [vmem:[%s0 + $0xb0] sm:$0xf]
    %v70 = vld [vmem:[%s0 + $0xb4] sm:$0xf]
    %v71 = vld [vmem:[%s0 + $0xb8] sm:$0xf]
    %v72 = vld [vmem:[%s0 + $0xbc] sm:$0xf]
    %v73 = vld [vmem:[%s0 + $0xc0] sm:$0xf]
    %v74 = vld [vmem:[%s0 + $0xc4] sm:$0xf]
    %v75 = vld [vmem:[%s0 + $0xc8] sm:$0xf]
    %v76 = vld [vmem:[%s0 + $0xcc] sm:$0xf]
    %v77 = vld [vmem:[%s0 + $0xd0] sm:$0xf]
    %v78 = vld [vmem:[%s0 + $0xd4] sm:$0xf]
    %v79 = vld [vmem:[%s0 + $0xd8] sm:$0xf]
    %v80 = vld [vmem:[%s0 + $0xdc] sm:$0xf]
    %v81 = vld [vmem:[%s0 + $0xe0] sm:$0xf]
    %v82 = vld [vmem:[%s0 + $0xe4] sm:$0xf]
    %v83 = vld [vmem:[%s0 + $0xe8] sm:$0xf]
    %v84 = vld [vmem:[%s0 + $0xec] sm:$0xf]
    %v85 = vld [vmem:[%s0 + $0xf0] sm:$0xf]
    %v86 = vld [vmem:[%s0 + $0xf4] sm:$0xf]
    %v87 = vld [vmem:[%s0 + $0xf8] sm:$0xf]
    %v88 = vld [vmem:[%s0 + $0xfc] sm:$0xf]
    %v89 = vld [vmem:[%s1] sm:$0xf]
    %v90 = vld [vmem:[%s1 + $0x4] sm:$0xf]
    %v91 = vld [vmem:[%s1 + $0x8] sm:$0xf]
    %v92 = vld [vmem:[%s1 + $0xc] sm:$0xf]
    %v157 = vunpack.c.l.b16 %v25
    %v158 = vunpack.c.l.b16 %v26
    %v159 = vunpack.c.l.b16 %v27
    %v160 = vunpack.c.l.b16 %v28
    %v161 = vunpack.c.l.b16 %v29
    %v162 = vunpack.c.l.b16 %v30
    %v163 = vunpack.c.l.b16 %v31
    %v164 = vunpack.c.l.b16 %v32
    %v165 = vunpack.c.l.b16 %v33
    %v166 = vunpack.c.l.b16 %v34
    %v167 = vunpack.c.l.b16 %v35
    %v168 = vunpack.c.l.b16 %v36
    %v169 = vunpack.c.l.b16 %v37
    %v170 = vunpack.c.l.b16 %v38
    %v171 = vunpack.c.l.b16 %v39
    %v172 = vunpack.c.l.b16 %v40
    %v173 = vunpack.c.l.b16 %v41
    %v174 = vunpack.c.l.b16 %v42
    %v175 = vunpack.c.l.b16 %v43
    %v176 = vunpack.c.l.b16 %v44
    %v177 = vunpack.c.l.b16 %v45
    %v178 = vunpack.c.l.b16 %v46
    %v179 = vunpack.c.l.b16 %v47
    %v180 = vunpack.c.l.b16 %v48
    %v181 = vunpack.c.l.b16 %v49
    %v182 = vunpack.c.l.b16 %v50
    %v183 = vunpack.c.l.b16 %v51
    %v184 = vunpack.c.l.b16 %v52
    %v185 = vunpack.c.l.b16 %v53
    %v186 = vunpack.c.l.b16 %v54
    %v187 = vunpack.c.l.b16 %v55
    %v188 = vunpack.c.l.b16 %v56
    %v189 = vunpack.c.l.b16 %v57
    %v190 = vunpack.c.l.b16 %v58
    %v191 = vunpack.c.l.b16 %v59
    %v192 = vunpack.c.l.b16 %v60
    %v193 = vunpack.c.l.b16 %v61
    %v194 = vunpack.c.l.b16 %v62
    %v195 = vunpack.c.l.b16 %v63
    %v196 = vunpack.c.l.b16 %v64
    %v197 = vunpack.c.l.b16 %v65
    %v198 = vunpack.c.l.b16 %v66
    %v199 = vunpack.c.l.b16 %v67
    %v200 = vunpack.c.l.b16 %v68
    %v201 = vunpack.c.l.b16 %v69
    %v202 = vunpack.c.l.b16 %v70
    %v203 = vunpack.c.l.b16 %v71
    %v204 = vunpack.c.l.b16 %v72
    %v205 = vunpack.c.l.b16 %v73
    %v206 = vunpack.c.l.b16 %v74
    %v207 = vunpack.c.l.b16 %v75
    %v208 = vunpack.c.l.b16 %v76
    %v209 = vunpack.c.l.b16 %v77
    %v210 = vunpack.c.l.b16 %v78
    %v211 = vunpack.c.l.b16 %v79
    %v212 = vunpack.c.l.b16 %v80
    %v213 = vunpack.c.l.b16 %v81
    %v214 = vunpack.c.l.b16 %v82
    %v215 = vunpack.c.l.b16 %v83
    %v216 = vunpack.c.l.b16 %v84
    %v217 = vunpack.c.l.b16 %v85
    %v218 = vunpack.c.l.b16 %v86
    %v219 = vunpack.c.l.b16 %v87
    %v220 = vunpack.c.l.b16 %v88
    %v221 = vpack.c.b16 %v158, %v157
    %v222 = vpack.c.b16 %v160, %v159
    %v223 = vpack.c.b16 %v162, %v161
    %v224 = vpack.c.b16 %v164, %v163
    %v225 = vpack.c.b16 %v166, %v165
    %v226 = vpack.c.b16 %v168, %v167
    %v227 = vpack.c.b16 %v170, %v169
    %v228 = vpack.c.b16 %v172, %v171
    %v229 = vpack.c.b16 %v174, %v173
    %v230 = vpack.c.b16 %v176, %v175
    %v231 = vpack.c.b16 %v178, %v177
    %v232 = vpack.c.b16 %v180, %v179
    %v233 = vpack.c.b16 %v182, %v181
    %v234 = vpack.c.b16 %v184, %v183
    %v235 = vpack.c.b16 %v186, %v185
    %v236 = vpack.c.b16 %v188, %v187
    %v237 = vpack.c.b16 %v190, %v189
    %v238 = vpack.c.b16 %v192, %v191
    %v239 = vpack.c.b16 %v194, %v193
    %v240 = vpack.c.b16 %v196, %v195
    %v241 = vpack.c.b16 %v198, %v197
    %v242 = vpack.c.b16 %v200, %v199
    %v243 = vpack.c.b16 %v202, %v201
    %v244 = vpack.c.b16 %v204, %v203
    %v245 = vpack.c.b16 %v206, %v205
    %v246 = vpack.c.b16 %v208, %v207
    %v247 = vpack.c.b16 %v210, %v209
    %v248 = vpack.c.b16 %v212, %v211
    %v249 = vpack.c.b16 %v214, %v213
    %v250 = vpack.c.b16 %v216, %v215
    %v251 = vpack.c.b16 %v218, %v217
    %v252 = vpack.c.b16 %v220, %v219
    %v257 = vunpack.c.l.b16 %v89
    %v258 = vunpack.c.l.b16 %v90
    %v259 = vunpack.c.l.b16 %v91
    %v260 = vunpack.c.l.b16 %v92
    %v261 = vpack.c.b16 %v258, %v257
    %v262 = vpack.c.b16 %v260, %v259
    %vm265 = vcmask 261120
    %v267 = vsel %vm265, %v221, 0
    %v270 = vsel %vm265, %v222, 0
    %v273 = vsel %vm265, %v223, 0
    %v276 = vsel %vm265, %v224, 0
    %v279 = vsel %vm265, %v225, 0
    %v282 = vsel %vm265, %v226, 0
    %v285 = vsel %vm265, %v227, 0
    %v288 = vsel %vm265, %v228, 0
    %v291 = vsel %vm265, %v229, 0
    %v294 = vsel %vm265, %v230, 0
    %v297 = vsel %vm265, %v231, 0
    %v300 = vsel %vm265, %v232, 0
    %v303 = vsel %vm265, %v233, 0
    %v306 = vsel %vm265, %v234, 0
    %v309 = vsel %vm265, %v235, 0
    %v312 = vsel %vm265, %v236, 0
    %v315 = vsel %vm265, %v237, 0
    %v318 = vsel %vm265, %v238, 0
    %v321 = vsel %vm265, %v239, 0
    %v324 = vsel %vm265, %v240, 0
    %v327 = vsel %vm265, %v241, 0
    %v330 = vsel %vm265, %v242, 0
    %v333 = vsel %vm265, %v243, 0
    %v336 = vsel %vm265, %v244, 0
    %v339 = vsel %vm265, %v245, 0
    %v342 = vsel %vm265, %v246, 0
    %v345 = vsel %vm265, %v247, 0
    %v348 = vsel %vm265, %v248, 0
    %v351 = vsel %vm265, %v249, 0
    %v354 = vsel %vm265, %v250, 0
    %v357 = vsel %vm265, %v251, 0
    %v360 = vsel %vm265, %v252, 0
    %362 = vmatprep.subr.bf16.mxu0 0
    %363 = vmatpush1.bf16.msra.mxu0 0
    %364 = vmatprep.subr.bf16.mxu0 0
    %365 = vmatpush1.bf16.msra.mxu0 0
    %366 = vmatprep.subr.bf16.mxu0 0
    %367 = vmatpush1.bf16.msra.mxu0 0
    %368 = vmatprep.subr.bf16.mxu0 0
    %369 = vmatpush1.bf16.msra.mxu0 0
    %370 = vmatprep.subr.bf16.mxu0 0
    %371 = vmatpush1.bf16.msra.mxu0 0
    %372 = vmatprep.subr.bf16.mxu0 0
    %373 = vmatpush1.bf16.msra.mxu0 0
    %374 = vmatprep.subr.bf16.mxu0 0
    %375 = vmatpush1.bf16.msra.mxu0 %v262
    %376 = vmatprep.subr.bf16.mxu0 0
    %377 = vmatpush1.bf16.msra.mxu0 %v261
    %378 = vmatprep.subr.bf16.mxu0 0
    %379 = vmatpush2.bf16.msra.mxu0 0
    %380 = vmatprep.subr.bf16.mxu0 0
    %381 = vmatpush2.bf16.msra.mxu0 0
    %382 = vmatprep.subr.bf16.mxu0 0
    %383 = vmatpush2.bf16.msra.mxu0 0
    %384 = vmatprep.subr.bf16.mxu0 0
    %385 = vmatpush2.bf16.msra.mxu0 0
    %386 = vmatprep.subr.bf16.mxu0 0
    %387 = vmatpush2.bf16.msra.mxu0 0
    %388 = vmatprep.subr.bf16.mxu0 0
    %389 = vmatpush2.bf16.msra.mxu0 0
    %390 = vmatprep.subr.bf16.mxu0 0
    %391 = vmatpush2.bf16.msra.mxu0 0
    %392 = vmatprep.subr.bf16.mxu0 0
    %393 = vmatpush2.bf16.msra.mxu0 0
    %394 = vmatprep.mubr.bf16.mxu0 0
    %395 = vmatmul.mubr.bf16.gmra.mxu0 %v267
    %v396 = vpop.f32.mrf.mxu0
    %v397 = vadd.f32 0.0, %v396
    %v398 = vpop.f32.mrf.mxu0
    %v399 = vpop.f32.mrf.mxu0
    %v400 = vadd.f32 0.0, %v399
    %v401 = vpop.f32.mrf.mxu0
    %402 = vmatprep.mubr.bf16.mxu0 0
    %403 = vmatmul.mubr.bf16.gmra.mxu0 %v270
    %v404 = vpop.f32.mrf.mxu0
    %v405 = vadd.f32 0.0, %v404
    %v406 = vpop.f32.mrf.mxu0
    %v407 = vpop.f32.mrf.mxu0
    %v408 = vadd.f32 0.0, %v407
    %v409 = vpop.f32.mrf.mxu0
    %410 = vmatprep.mubr.bf16.mxu0 0
    %411 = vmatmul.mubr.bf16.gmra.mxu0 %v273
    %v412 = vpop.f32.mrf.mxu0
    %v413 = vadd.f32 0.0, %v412
    %v414 = vpop.f32.mrf.mxu0
    %v415 = vpop.f32.mrf.mxu0
    %v416 = vadd.f32 0.0, %v415
    %v417 = vpop.f32.mrf.mxu0
    %418 = vmatprep.mubr.bf16.mxu0 0
    %419 = vmatmul.mubr.bf16.gmra.mxu0 %v276
    %v420 = vpop.f32.mrf.mxu0
    %v421 = vadd.f32 0.0, %v420
    %v422 = vpop.f32.mrf.mxu0
    %v423 = vpop.f32.mrf.mxu0
    %v424 = vadd.f32 0.0, %v423
    %v425 = vpop.f32.mrf.mxu0
    %426 = vmatprep.mubr.bf16.mxu0 0
    %427 = vmatmul.mubr.bf16.gmra.mxu0 %v279
    %v428 = vpop.f32.mrf.mxu0
    %v429 = vadd.f32 0.0, %v428
    %v430 = vpop.f32.mrf.mxu0
    %v431 = vpop.f32.mrf.mxu0
    %v432 = vadd.f32 0.0, %v431
    %v433 = vpop.f32.mrf.mxu0
    %434 = vmatprep.mubr.bf16.mxu0 0
    %435 = vmatmul.mubr.bf16.gmra.mxu0 %v282
    %v436 = vpop.f32.mrf.mxu0
    %v437 = vadd.f32 0.0, %v436
    %v438 = vpop.f32.mrf.mxu0
    %v439 = vpop.f32.mrf.mxu0
    %v440 = vadd.f32 0.0, %v439
    %v441 = vpop.f32.mrf.mxu0
    %442 = vmatprep.mubr.bf16.mxu0 0
    %443 = vmatmul.mubr.bf16.gmra.mxu0 %v285
    %v444 = vpop.f32.mrf.mxu0
    %v445 = vadd.f32 0.0, %v444
    %v446 = vpop.f32.mrf.mxu0
    %v447 = vpop.f32.mrf.mxu0
    %v448 = vadd.f32 0.0, %v447
    %v449 = vpop.f32.mrf.mxu0
    %450 = vmatprep.mubr.bf16.mxu0 0
    %451 = vmatmul.mubr.bf16.gmra.mxu0 %v288
    %v452 = vpop.f32.mrf.mxu0
    %v453 = vadd.f32 0.0, %v452
    %v454 = vpop.f32.mrf.mxu0
    %v455 = vpop.f32.mrf.mxu0
    %v456 = vadd.f32 0.0, %v455
    %v457 = vpop.f32.mrf.mxu0
    %458 = vmatprep.mubr.bf16.mxu0 0
    %459 = vmatmul.mubr.bf16.gmra.mxu0 %v291
    %v460 = vpop.f32.mrf.mxu0
    %v461 = vadd.f32 0.0, %v460
    %v462 = vpop.f32.mrf.mxu0
    %v463 = vpop.f32.mrf.mxu0
    %v464 = vadd.f32 0.0, %v463
    %v465 = vpop.f32.mrf.mxu0
    %466 = vmatprep.mubr.bf16.mxu0 0
    %467 = vmatmul.mubr.bf16.gmra.mxu0 %v294
    %v468 = vpop.f32.mrf.mxu0
    %v469 = vadd.f32 0.0, %v468
    %v470 = vpop.f32.mrf.mxu0
    %v471 = vpop.f32.mrf.mxu0
    %v472 = vadd.f32 0.0, %v471
    %v473 = vpop.f32.mrf.mxu0
    %474 = vmatprep.mubr.bf16.mxu0 0
    %475 = vmatmul.mubr.bf16.gmra.mxu0 %v297
    %v476 = vpop.f32.mrf.mxu0
    %v477 = vadd.f32 0.0, %v476
    %v478 = vpop.f32.mrf.mxu0
    %v479 = vpop.f32.mrf.mxu0
    %v480 = vadd.f32 0.0, %v479
    %v481 = vpop.f32.mrf.mxu0
    %482 = vmatprep.mubr.bf16.mxu0 0
    %483 = vmatmul.mubr.bf16.gmra.mxu0 %v300
    %v484 = vpop.f32.mrf.mxu0
    %v485 = vadd.f32 0.0, %v484
    %v486 = vpop.f32.mrf.mxu0
    %v487 = vpop.f32.mrf.mxu0
    %v488 = vadd.f32 0.0, %v487
    %v489 = vpop.f32.mrf.mxu0
    %490 = vmatprep.mubr.bf16.mxu0 0
    %491 = vmatmul.mubr.bf16.gmra.mxu0 %v303
    %v492 = vpop.f32.mrf.mxu0
    %v493 = vadd.f32 0.0, %v492
    %v494 = vpop.f32.mrf.mxu0
    %v495 = vpop.f32.mrf.mxu0
    %v496 = vadd.f32 0.0, %v495
    %v497 = vpop.f32.mrf.mxu0
    %498 = vmatprep.mubr.bf16.mxu0 0
    %499 = vmatmul.mubr.bf16.gmra.mxu0 %v306
    %v500 = vpop.f32.mrf.mxu0
    %v501 = vadd.f32 0.0, %v500
    %v502 = vpop.f32.mrf.mxu0
    %v503 = vpop.f32.mrf.mxu0
    %v504 = vadd.f32 0.0, %v503
    %v505 = vpop.f32.mrf.mxu0
    %506 = vmatprep.mubr.bf16.mxu0 0
    %507 = vmatmul.mubr.bf16.gmra.mxu0 %v309
    %v508 = vpop.f32.mrf.mxu0
    %v509 = vadd.f32 0.0, %v508
    %v510 = vpop.f32.mrf.mxu0
    %v511 = vpop.f32.mrf.mxu0
    %v512 = vadd.f32 0.0, %v511
    %v513 = vpop.f32.mrf.mxu0
    %514 = vmatprep.mubr.bf16.mxu0 0
    %515 = vmatmul.mubr.bf16.gmra.mxu0 %v312
    %v516 = vpop.f32.mrf.mxu0
    %v517 = vadd.f32 0.0, %v516
    %v518 = vpop.f32.mrf.mxu0
    %v519 = vpop.f32.mrf.mxu0
    %v520 = vadd.f32 0.0, %v519
    %v521 = vpop.f32.mrf.mxu0
    %522 = vmatprep.mubr.bf16.mxu0 0
    %523 = vmatmul.mubr.bf16.gmra.mxu0 %v315
    %v524 = vpop.f32.mrf.mxu0
    %v525 = vadd.f32 0.0, %v524
    %v526 = vpop.f32.mrf.mxu0
    %v527 = vpop.f32.mrf.mxu0
    %v528 = vadd.f32 0.0, %v527
    %v529 = vpop.f32.mrf.mxu0
    %530 = vmatprep.mubr.bf16.mxu0 0
    %531 = vmatmul.mubr.bf16.gmra.mxu0 %v318
    %v532 = vpop.f32.mrf.mxu0
    %v533 = vadd.f32 0.0, %v532
    %v534 = vpop.f32.mrf.mxu0
    %v535 = vpop.f32.mrf.mxu0
    %v536 = vadd.f32 0.0, %v535
    %v537 = vpop.f32.mrf.mxu0
    %538 = vmatprep.mubr.bf16.mxu0 0
    %539 = vmatmul.mubr.bf16.gmra.mxu0 %v321
    %v540 = vpop.f32.mrf.mxu0
    %v541 = vadd.f32 0.0, %v540
    %v542 = vpop.f32.mrf.mxu0
    %v543 = vpop.f32.mrf.mxu0
    %v544 = vadd.f32 0.0, %v543
    %v545 = vpop.f32.mrf.mxu0
    %546 = vmatprep.mubr.bf16.mxu0 0
    %547 = vmatmul.mubr.bf16.gmra.mxu0 %v324
    %v548 = vpop.f32.mrf.mxu0
    %v549 = vadd.f32 0.0, %v548
    %v550 = vpop.f32.mrf.mxu0
    %v551 = vpop.f32.mrf.mxu0
    %v552 = vadd.f32 0.0, %v551
    %v553 = vpop.f32.mrf.mxu0
    %554 = vmatprep.mubr.bf16.mxu0 0
    %555 = vmatmul.mubr.bf16.gmra.mxu0 %v327
    %v556 = vpop.f32.mrf.mxu0
    %v557 = vadd.f32 0.0, %v556
    %v558 = vpop.f32.mrf.mxu0
    %v559 = vpop.f32.mrf.mxu0
    %v560 = vadd.f32 0.0, %v559
    %v561 = vpop.f32.mrf.mxu0
    %562 = vmatprep.mubr.bf16.mxu0 0
    %563 = vmatmul.mubr.bf16.gmra.mxu0 %v330
    %v564 = vpop.f32.mrf.mxu0
    %v565 = vadd.f32 0.0, %v564
    %v566 = vpop.f32.mrf.mxu0
    %v567 = vpop.f32.mrf.mxu0
    %v568 = vadd.f32 0.0, %v567
    %v569 = vpop.f32.mrf.mxu0
    %570 = vmatprep.mubr.bf16.mxu0 0
    %571 = vmatmul.mubr.bf16.gmra.mxu0 %v333
    %v572 = vpop.f32.mrf.mxu0
    %v573 = vadd.f32 0.0, %v572
    %v574 = vpop.f32.mrf.mxu0
    %v575 = vpop.f32.mrf.mxu0
    %v576 = vadd.f32 0.0, %v575
    %v577 = vpop.f32.mrf.mxu0
    %578 = vmatprep.mubr.bf16.mxu0 0
    %579 = vmatmul.mubr.bf16.gmra.mxu0 %v336
    %v580 = vpop.f32.mrf.mxu0
    %v581 = vadd.f32 0.0, %v580
    %v582 = vpop.f32.mrf.mxu0
    %v583 = vpop.f32.mrf.mxu0
    %v584 = vadd.f32 0.0, %v583
    %v585 = vpop.f32.mrf.mxu0
    %586 = vmatprep.mubr.bf16.mxu0 0
    %587 = vmatmul.mubr.bf16.gmra.mxu0 %v339
    %v588 = vpop.f32.mrf.mxu0
    %v589 = vadd.f32 0.0, %v588
    %v590 = vpop.f32.mrf.mxu0
    %v591 = vpop.f32.mrf.mxu0
    %v592 = vadd.f32 0.0, %v591
    %v593 = vpop.f32.mrf.mxu0
    %594 = vmatprep.mubr.bf16.mxu0 0
    %595 = vmatmul.mubr.bf16.gmra.mxu0 %v342
    %v596 = vpop.f32.mrf.mxu0
    %v597 = vadd.f32 0.0, %v596
    %v598 = vpop.f32.mrf.mxu0
    %v599 = vpop.f32.mrf.mxu0
    %v600 = vadd.f32 0.0, %v599
    %v601 = vpop.f32.mrf.mxu0
    %602 = vmatprep.mubr.bf16.mxu0 0
    %603 = vmatmul.mubr.bf16.gmra.mxu0 %v345
    %v604 = vpop.f32.mrf.mxu0
    %v605 = vadd.f32 0.0, %v604
    %v606 = vpop.f32.mrf.mxu0
    %v607 = vpop.f32.mrf.mxu0
    %v608 = vadd.f32 0.0, %v607
    %v609 = vpop.f32.mrf.mxu0
    %610 = vmatprep.mubr.bf16.mxu0 0
    %611 = vmatmul.mubr.bf16.gmra.mxu0 %v348
    %v612 = vpop.f32.mrf.mxu0
    %v613 = vadd.f32 0.0, %v612
    %v614 = vpop.f32.mrf.mxu0
    %v615 = vpop.f32.mrf.mxu0
    %v616 = vadd.f32 0.0, %v615
    %v617 = vpop.f32.mrf.mxu0
    %618 = vmatprep.mubr.bf16.mxu0 0
    %619 = vmatmul.mubr.bf16.gmra.mxu0 %v351
    %v620 = vpop.f32.mrf.mxu0
    %v621 = vadd.f32 0.0, %v620
    %v622 = vpop.f32.mrf.mxu0
    %v623 = vpop.f32.mrf.mxu0
    %v624 = vadd.f32 0.0, %v623
    %v625 = vpop.f32.mrf.mxu0
    %626 = vmatprep.mubr.bf16.mxu0 0
    %627 = vmatmul.mubr.bf16.gmra.mxu0 %v354
    %v628 = vpop.f32.mrf.mxu0
    %v629 = vadd.f32 0.0, %v628
    %v630 = vpop.f32.mrf.mxu0
    %v631 = vpop.f32.mrf.mxu0
    %v632 = vadd.f32 0.0, %v631
    %v633 = vpop.f32.mrf.mxu0
    %634 = vmatprep.mubr.bf16.mxu0 0
    %635 = vmatmul.mubr.bf16.gmra.mxu0 %v357
    %v636 = vpop.f32.mrf.mxu0
    %v637 = vadd.f32 0.0, %v636
    %v638 = vpop.f32.mrf.mxu0
    %v639 = vpop.f32.mrf.mxu0
    %v640 = vadd.f32 0.0, %v639
    %v641 = vpop.f32.mrf.mxu0
    %642 = vmatprep.mubr.bf16.mxu0 0
    %643 = vmatmul.mubr.bf16.gmra.mxu0 %v360
    %v644 = vpop.f32.mrf.mxu0
    %v645 = vadd.f32 0.0, %v644
    %v646 = vpop.f32.mrf.mxu0
    %v647 = vpop.f32.mrf.mxu0
    %v648 = vadd.f32 0.0, %v647
    %v649 = vpop.f32.mrf.mxu0
    %650 = vdwg.mxu0
    %s651 = smul.u32 0, 512
    %s652 = scalar_lea.vmem [#allocation2], %s651
    %653 = vst [vmem:[%s652] sm:$0xff] %v397
    %654 = vst [vmem:[%s652 + $0x8] sm:$0xff] %v400
    %655 = vst [vmem:[%s652 + $0x10] sm:$0xff] %v405
    %656 = vst [vmem:[%s652 + $0x18] sm:$0xff] %v408
    %657 = vst [vmem:[%s652 + $0x20] sm:$0xff] %v413
    %658 = vst [vmem:[%s652 + $0x28] sm:$0xff] %v416
    %659 = vst [vmem:[%s652 + $0x30] sm:$0xff] %v421
    %660 = vst [vmem:[%s652 + $0x38] sm:$0xff] %v424
    %661 = vst [vmem:[%s652 + $0x40] sm:$0xff] %v429
    %662 = vst [vmem:[%s652 + $0x48] sm:$0xff] %v432
    %663 = vst [vmem:[%s652 + $0x50] sm:$0xff] %v437
    %664 = vst [vmem:[%s652 + $0x58] sm:$0xff] %v440
    %665 = vst [vmem:[%s652 + $0x60] sm:$0xff] %v445
    %666 = vst [vmem:[%s652 + $0x68] sm:$0xff] %v448
    %667 = vst [vmem:[%s652 + $0x70] sm:$0xff] %v453
    %668 = vst [vmem:[%s652 + $0x78] sm:$0xff] %v456
    %669 = vst [vmem:[%s652 + $0x80] sm:$0xff] %v461
    %670 = vst [vmem:[%s652 + $0x88] sm:$0xff] %v464
    %671 = vst [vmem:[%s652 + $0x90] sm:$0xff] %v469
    %672 = vst [vmem:[%s652 + $0x98] sm:$0xff] %v472
    %673 = vst [vmem:[%s652 + $0xa0] sm:$0xff] %v477
    %674 = vst [vmem:[%s652 + $0xa8] sm:$0xff] %v480
    %675 = vst [vmem:[%s652 + $0xb0] sm:$0xff] %v485
    %676 = vst [vmem:[%s652 + $0xb8] sm:$0xff] %v488
    %677 = vst [vmem:[%s652 + $0xc0] sm:$0xff] %v493
    %678 = vst [vmem:[%s652 + $0xc8] sm:$0xff] %v496
    %679 = vst [vmem:[%s652 + $0xd0] sm:$0xff] %v501
    %680 = vst [vmem:[%s652 + $0xd8] sm:$0xff] %v504
    %681 = vst [vmem:[%s652 + $0xe0] sm:$0xff] %v509
    %682 = vst [vmem:[%s652 + $0xe8] sm:$0xff] %v512
    %683 = vst [vmem:[%s652 + $0xf0] sm:$0xff] %v517
    %684 = vst [vmem:[%s652 + $0xf8] sm:$0xff] %v520
    %685 = vst [vmem:[%s652 + $0x100] sm:$0xff] %v525
    %686 = vst [vmem:[%s652 + $0x108] sm:$0xff] %v528
    %687 = vst [vmem:[%s652 + $0x110] sm:$0xff] %v533
    %688 = vst [vmem:[%s652 + $0x118] sm:$0xff] %v536
    %689 = vst [vmem:[%s652 + $0x120] sm:$0xff] %v541
    %690 = vst [vmem:[%s652 + $0x128] sm:$0xff] %v544
    %691 = vst [vmem:[%s652 + $0x130] sm:$0xff] %v549
    %692 = vst [vmem:[%s652 + $0x138] sm:$0xff] %v552
    %693 = vst [vmem:[%s652 + $0x140] sm:$0xff] %v557
    %694 = vst [vmem:[%s652 + $0x148] sm:$0xff] %v560
    %695 = vst [vmem:[%s652 + $0x150] sm:$0xff] %v565
    %696 = vst [vmem:[%s652 + $0x158] sm:$0xff] %v568
    %697 = vst [vmem:[%s652 + $0x160] sm:$0xff] %v573
    %698 = vst [vmem:[%s652 + $0x168] sm:$0xff] %v576
    %699 = vst [vmem:[%s652 + $0x170] sm:$0xff] %v581
    %700 = vst [vmem:[%s652 + $0x178] sm:$0xff] %v584
    %701 = vst [vmem:[%s652 + $0x180] sm:$0xff] %v589
    %702 = vst [vmem:[%s652 + $0x188] sm:$0xff] %v592
    %703 = vst [vmem:[%s652 + $0x190] sm:$0xff] %v597
    %704 = vst [vmem:[%s652 + $0x198] sm:$0xff] %v600
    %705 = vst [vmem:[%s652 + $0x1a0] sm:$0xff] %v605
    %706 = vst [vmem:[%s652 + $0x1a8] sm:$0xff] %v608
    %707 = vst [vmem:[%s652 + $0x1b0] sm:$0xff] %v613
    %708 = vst [vmem:[%s652 + $0x1b8] sm:$0xff] %v616
    %709 = vst [vmem:[%s652 + $0x1c0] sm:$0xff] %v621
    %710 = vst [vmem:[%s652 + $0x1c8] sm:$0xff] %v624
    %711 = vst [vmem:[%s652 + $0x1d0] sm:$0xff] %v629
    %712 = vst [vmem:[%s652 + $0x1d8] sm:$0xff] %v632
    %713 = vst [vmem:[%s652 + $0x1e0] sm:$0xff] %v637
    %714 = vst [vmem:[%s652 + $0x1e8] sm:$0xff] %v640
    %715 = vst [vmem:[%s652 + $0x1f0] sm:$0xff] %v645
    %716 = vst [vmem:[%s652 + $0x1f8] sm:$0xff] %v648
    %v717 = vld [vmem:[#allocation3] sm:$0x1]
    %v718 = vadd.f32 %v397, %v400
    %v719 = vadd.f32 %v718, %v405
    %v720 = vadd.f32 %v719, %v408
    %v721 = vadd.f32 %v720, %v413
    %v722 = vadd.f32 %v721, %v416
    %v723 = vadd.f32 %v722, %v421
    %v724 = vadd.f32 %v723, %v424
    %v725 = vadd.f32 %v724, %v429
    %v726 = vadd.f32 %v725, %v432
    %v727 = vadd.f32 %v726, %v437
    %v728 = vadd.f32 %v727, %v440
    %v729 = vadd.f32 %v728, %v445
    %v730 = vadd.f32 %v729, %v448
    %v731 = vadd.f32 %v730, %v453
    %v732 = vadd.f32 %v731, %v456
    %v733 = vadd.f32 %v732, %v461
    %v734 = vadd.f32 %v733, %v464
    %v735 = vadd.f32 %v734, %v469
    %v736 = vadd.f32 %v735, %v472
    %v737 = vadd.f32 %v736, %v477
    %v738 = vadd.f32 %v737, %v480
    %v739 = vadd.f32 %v738, %v485
    %v740 = vadd.f32 %v739, %v488
    %v741 = vadd.f32 %v740, %v493
    %v742 = vadd.f32 %v741, %v496
    %v743 = vadd.f32 %v742, %v501
    %v744 = vadd.f32 %v743, %v504
    %v745 = vadd.f32 %v744, %v509
    %v746 = vadd.f32 %v745, %v512
    %v747 = vadd.f32 %v746, %v517
    %v748 = vadd.f32 %v747, %v520
    %v749 = vadd.f32 %v748, %v525
    %v750 = vadd.f32 %v749, %v528
    %v751 = vadd.f32 %v750, %v533
    %v752 = vadd.f32 %v751, %v536
    %v753 = vadd.f32 %v752, %v541
    %v754 = vadd.f32 %v753, %v544
    %v755 = vadd.f32 %v754, %v549
    %v756 = vadd.f32 %v755, %v552
    %v757 = vadd.f32 %v756, %v557
    %v758 = vadd.f32 %v757, %v560
    %v759 = vadd.f32 %v758, %v565
    %v760 = vadd.f32 %v759, %v568
    %v761 = vadd.f32 %v760, %v573
    %v762 = vadd.f32 %v761, %v576
    %v763 = vadd.f32 %v762, %v581
    %v764 = vadd.f32 %v763, %v584
    %v765 = vadd.f32 %v764, %v589
    %v766 = vadd.f32 %v765, %v592
    %v767 = vadd.f32 %v766, %v597
    %v768 = vadd.f32 %v767, %v600
    %v769 = vadd.f32 %v768, %v605
    %v770 = vadd.f32 %v769, %v608
    %v771 = vadd.f32 %v770, %v613
    %v772 = vadd.f32 %v771, %v616
    %v773 = vadd.f32 %v772, %v621
    %v774 = vadd.f32 %v773, %v624
    %v775 = vadd.f32 %v774, %v629
    %v776 = vadd.f32 %v775, %v632
    %v777 = vadd.f32 %v776, %v637
    %v778 = vadd.f32 %v777, %v640
    %v779 = vadd.f32 %v778, %v645
    %v780 = vadd.f32 %v779, %v648
    %v781 = vrot.slane %v780, 4
    %v782 = vadd.f32 %v780, %v781
    %v783 = vrot.slane %v782, 2
    %v784 = vadd.f32 %v782, %v783
    %v785 = vrot.slane %v784, 1
    %v786 = vadd.f32 %v784, %v785
    %v787 = vadd.f32 %v717, %v786
    %788 = vst [vmem:[#allocation3] sm:$0x1] %v787
    %v789 = vld [vmem:[#allocation4] sm:$0x1]
    %v790 = vmul.f32 %v397, %v397
    %v791 = vmul.f32 %v400, %v400
    %v792 = vmul.f32 %v405, %v405
    %v793 = vmul.f32 %v408, %v408
    %v794 = vmul.f32 %v413, %v413
    %v795 = vmul.f32 %v416, %v416
    %v796 = vmul.f32 %v421, %v421
    %v797 = vmul.f32 %v424, %v424
    %v798 = vmul.f32 %v429, %v429
    %v799 = vmul.f32 %v432, %v432
    %v800 = vmul.f32 %v437, %v437
    %v801 = vmul.f32 %v440, %v440
    %v802 = vmul.f32 %v445, %v445
    %v803 = vmul.f32 %v448, %v448
    %v804 = vmul.f32 %v453, %v453
    %v805 = vmul.f32 %v456, %v456
    %v806 = vmul.f32 %v461, %v461
    %v807 = vmul.f32 %v464, %v464
    %v808 = vmul.f32 %v469, %v469
    %v809 = vmul.f32 %v472, %v472
    %v810 = vmul.f32 %v477, %v477
    %v811 = vmul.f32 %v480, %v480
    %v812 = vmul.f32 %v485, %v485
    %v813 = vmul.f32 %v488, %v488
    %v814 = vmul.f32 %v493, %v493
    %v815 = vmul.f32 %v496, %v496
    %v816 = vmul.f32 %v501, %v501
    %v817 = vmul.f32 %v504, %v504
    %v818 = vmul.f32 %v509, %v509
    %v819 = vmul.f32 %v512, %v512
    %v820 = vmul.f32 %v517, %v517
    %v821 = vmul.f32 %v520, %v520
    %v822 = vmul.f32 %v525, %v525
    %v823 = vmul.f32 %v528, %v528
    %v824 = vmul.f32 %v533, %v533
    %v825 = vmul.f32 %v536, %v536
    %v826 = vmul.f32 %v541, %v541
    %v827 = vmul.f32 %v544, %v544
    %v828 = vmul.f32 %v549, %v549
    %v829 = vmul.f32 %v552, %v552
    %v830 = vmul.f32 %v557, %v557
    %v831 = vmul.f32 %v560, %v560
    %v832 = vmul.f32 %v565, %v565
    %v833 = vmul.f32 %v568, %v568
    %v834 = vmul.f32 %v573, %v573
    %v835 = vmul.f32 %v576, %v576
    %v836 = vmul.f32 %v581, %v581
    %v837 = vmul.f32 %v584, %v584
    %v838 = vmul.f32 %v589, %v589
    %v839 = vmul.f32 %v592, %v592
    %v840 = vmul.f32 %v597, %v597
    %v841 = vmul.f32 %v600, %v600
    %v842 = vmul.f32 %v605, %v605
    %v843 = vmul.f32 %v608, %v608
    %v844 = vmul.f32 %v613, %v613
    %v845 = vmul.f32 %v616, %v616
    %v846 = vmul.f32 %v621, %v621
    %v847 = vmul.f32 %v624, %v624
    %v848 = vmul.f32 %v629, %v629
    %v849 = vmul.f32 %v632, %v632
    %v850 = vmul.f32 %v637, %v637
    %v851 = vmul.f32 %v640, %v640
    %v852 = vmul.f32 %v645, %v645
    %v853 = vmul.f32 %v648, %v648
    %v854 = vadd.f32 %v790, %v791
    %v855 = vadd.f32 %v854, %v792
    %v856 = vadd.f32 %v855, %v793
    %v857 = vadd.f32 %v856, %v794
    %v858 = vadd.f32 %v857, %v795
    %v859 = vadd.f32 %v858, %v796
    %v860 = vadd.f32 %v859, %v797
    %v861 = vadd.f32 %v860, %v798
    %v862 = vadd.f32 %v861, %v799
    %v863 = vadd.f32 %v862, %v800
    %v864 = vadd.f32 %v863, %v801
    %v865 = vadd.f32 %v864, %v802
    %v866 = vadd.f32 %v865, %v803
    %v867 = vadd.f32 %v866, %v804
    %v868 = vadd.f32 %v867, %v805
    %v869 = vadd.f32 %v868, %v806
    %v870 = vadd.f32 %v869, %v807
    %v871 = vadd.f32 %v870, %v808
    %v872 = vadd.f32 %v871, %v809
    %v873 = vadd.f32 %v872, %v810
    %v874 = vadd.f32 %v873, %v811
    %v875 = vadd.f32 %v874, %v812
    %v876 = vadd.f32 %v875, %v813
    %v877 = vadd.f32 %v876, %v814
    %v878 = vadd.f32 %v877, %v815
    %v879 = vadd.f32 %v878, %v816
    %v880 = vadd.f32 %v879, %v817
    %v881 = vadd.f32 %v880, %v818
    %v882 = vadd.f32 %v881, %v819
    %v883 = vadd.f32 %v882, %v820
    %v884 = vadd.f32 %v883, %v821
    %v885 = vadd.f32 %v884, %v822
    %v886 = vadd.f32 %v885, %v823
    %v887 = vadd.f32 %v886, %v824
    %v888 = vadd.f32 %v887, %v825
    %v889 = vadd.f32 %v888, %v826
    %v890 = vadd.f32 %v889, %v827
    %v891 = vadd.f32 %v890, %v828
    %v892 = vadd.f32 %v891, %v829
    %v893 = vadd.f32 %v892, %v830
    %v894 = vadd.f32 %v893, %v831
    %v895 = vadd.f32 %v894, %v832
    %v896 = vadd.f32 %v895, %v833
    %v897 = vadd.f32 %v896, %v834
    %v898 = vadd.f32 %v897, %v835
    %v899 = vadd.f32 %v898, %v836
    %v900 = vadd.f32 %v899, %v837
    %v901 = vadd.f32 %v900, %v838
    %v902 = vadd.f32 %v901, %v839
    %v903 = vadd.f32 %v902, %v840
    %v904 = vadd.f32 %v903, %v841
    %v905 = vadd.f32 %v904, %v842
    %v906 = vadd.f32 %v905, %v843
    %v907 = vadd.f32 %v906, %v844
    %v908 = vadd.f32 %v907, %v845
    %v909 = vadd.f32 %v908, %v846
    %v910 = vadd.f32 %v909, %v847
    %v911 = vadd.f32 %v910, %v848
    %v912 = vadd.f32 %v911, %v849
    %v913 = vadd.f32 %v912, %v850
    %v914 = vadd.f32 %v913, %v851
    %v915 = vadd.f32 %v914, %v852
    %v916 = vadd.f32 %v915, %v853
    %v917 = vrot.slane %v916, 4
    %v918 = vadd.f32 %v916, %v917
    %v919 = vrot.slane %v918, 2
    %v920 = vadd.f32 %v918, %v919
    %v921 = vrot.slane %v920, 1
    %v922 = vadd.f32 %v920, %v921
    %v923 = vadd.f32 %v789, %v922
    %924 = vst [vmem:[#allocation4] sm:$0x1] %v923
    // Predicated region
    $region22: #{tpu_custom_call.1} parent=1 // pred_check
      %p925 = pneg %p19
    $region23: #{tpu_custom_call.1} parent=1 // pred_check_branch
      %927 = sbr.rel (%p925) target = $region25
    $region24: #{tpu_custom_call.1} parent=1 // pred_region
      %v928 = vld [vmem:[#allocation3] sm:$0x1]
      %v929 = vmul.f32 %v928, 0.001953125
      %v930 = vld [vmem:[#allocation4] sm:$0x1]
      %v931 = vmul.f32 %v930, 0.001953125
      %v932 = vmul.f32 %v929, %v929
      %v933 = vsub.f32 %v931, %v932
      %v934 = vmax.f32 %v933, 0.0
      %v935 = vld [vmem:[%s2] sm:$0x1]
      %v936 = vadd.f32 %v934, 1e-05
      %v937 = vrsqrt.pop %v936
      %v938 = vmul.f32 %v935, %v937
      %v939 = vld [vmem:[%s3] sm:$0x1]
      %v940 = vmul.f32 %v929, %v938
      %v941 = vsub.f32 %v939, %v940
      %v942 = vld [vmem:[#allocation2] sm:$0xff]
      %v943 = vld [vmem:[#allocation2 + $0x8] sm:$0xff]
      %v944 = vld [vmem:[#allocation2 + $0x10] sm:$0xff]
      %v945 = vld [vmem:[#allocation2 + $0x18] sm:$0xff]
      %v946 = vld [vmem:[#allocation2 + $0x20] sm:$0xff]
      %v947 = vld [vmem:[#allocation2 + $0x28] sm:$0xff]
      %v948 = vld [vmem:[#allocation2 + $0x30] sm:$0xff]
      %v949 = vld [vmem:[#allocation2 + $0x38] sm:$0xff]
      %v950 = vld [vmem:[#allocation2 + $0x40] sm:$0xff]
      %v951 = vld [vmem:[#allocation2 + $0x48] sm:$0xff]
      %v952 = vld [vmem:[#allocation2 + $0x50] sm:$0xff]
      %v953 = vld [vmem:[#allocation2 + $0x58] sm:$0xff]
      %v954 = vld [vmem:[#allocation2 + $0x60] sm:$0xff]
      %v955 = vld [vmem:[#allocation2 + $0x68] sm:$0xff]
      %v956 = vld [vmem:[#allocation2 + $0x70] sm:$0xff]
      %v957 = vld [vmem:[#allocation2 + $0x78] sm:$0xff]
      %v958 = vld [vmem:[#allocation2 + $0x80] sm:$0xff]
      %v959 = vld [vmem:[#allocation2 + $0x88] sm:$0xff]
      %v960 = vld [vmem:[#allocation2 + $0x90] sm:$0xff]
      %v961 = vld [vmem:[#allocation2 + $0x98] sm:$0xff]
      %v962 = vld [vmem:[#allocation2 + $0xa0] sm:$0xff]
      %v963 = vld [vmem:[#allocation2 + $0xa8] sm:$0xff]
      %v964 = vld [vmem:[#allocation2 + $0xb0] sm:$0xff]
      %v965 = vld [vmem:[#allocation2 + $0xb8] sm:$0xff]
      %v966 = vld [vmem:[#allocation2 + $0xc0] sm:$0xff]
      %v967 = vld [vmem:[#allocation2 + $0xc8] sm:$0xff]
      %v968 = vld [vmem:[#allocation2 + $0xd0] sm:$0xff]
      %v969 = vld [vmem:[#allocation2 + $0xd8] sm:$0xff]
      %v970 = vld [vmem:[#allocation2 + $0xe0] sm:$0xff]
      %v971 = vld [vmem:[#allocation2 + $0xe8] sm:$0xff]
      %v972 = vld [vmem:[#allocation2 + $0xf0] sm:$0xff]
      %v973 = vld [vmem:[#allocation2 + $0xf8] sm:$0xff]
      %v974 = vld [vmem:[#allocation2 + $0x100] sm:$0xff]
      %v975 = vld [vmem:[#allocation2 + $0x108] sm:$0xff]
      %v976 = vld [vmem:[#allocation2 + $0x110] sm:$0xff]
      %v977 = vld [vmem:[#allocation2 + $0x118] sm:$0xff]
      %v978 = vld [vmem:[#allocation2 + $0x120] sm:$0xff]
      %v979 = vld [vmem:[#allocation2 + $0x128] sm:$0xff]
      %v980 = vld [vmem:[#allocation2 + $0x130] sm:$0xff]
      %v981 = vld [vmem:[#allocation2 + $0x138] sm:$0xff]
      %v982 = vld [vmem:[#allocation2 + $0x140] sm:$0xff]
      %v983 = vld [vmem:[#allocation2 + $0x148] sm:$0xff]
      %v984 = vld [vmem:[#allocation2 + $0x150] sm:$0xff]
      %v985 = vld [vmem:[#allocation2 + $0x158] sm:$0xff]
      %v986 = vld [vmem:[#allocation2 + $0x160] sm:$0xff]
      %v987 = vld [vmem:[#allocation2 + $0x168] sm:$0xff]
      %v988 = vld [vmem:[#allocation2 + $0x170] sm:$0xff]
      %v989 = vld [vmem:[#allocation2 + $0x178] sm:$0xff]
      %v990 = vld [vmem:[#allocation2 + $0x180] sm:$0xff]
      %v991 = vld [vmem:[#allocation2 + $0x188] sm:$0xff]
      %v992 = vld [vmem:[#allocation2 + $0x190] sm:$0xff]
      %v993 = vld [vmem:[#allocation2 + $0x198] sm:$0xff]
      %v994 = vld [vmem:[#allocation2 + $0x1a0] sm:$0xff]
      %v995 = vld [vmem:[#allocation2 + $0x1a8] sm:$0xff]
      %v996 = vld [vmem:[#allocation2 + $0x1b0] sm:$0xff]
      %v997 = vld [vmem:[#allocation2 + $0x1b8] sm:$0xff]
      %v998 = vld [vmem:[#allocation2 + $0x1c0] sm:$0xff]
      %v999 = vld [vmem:[#allocation2 + $0x1c8] sm:$0xff]
      %v1000 = vld [vmem:[#allocation2 + $0x1d0] sm:$0xff]
      %v1001 = vld [vmem:[#allocation2 + $0x1d8] sm:$0xff]
      %v1002 = vld [vmem:[#allocation2 + $0x1e0] sm:$0xff]
      %v1003 = vld [vmem:[#allocation2 + $0x1e8] sm:$0xff]
      %v1004 = vld [vmem:[#allocation2 + $0x1f0] sm:$0xff]
      %v1005 = vld [vmem:[#allocation2 + $0x1f8] sm:$0xff]
      %v1007 = vlaneseq
      %v1008 = vshrl.u32 %v1007, 7
      %v1009 = vsub.s32 0, %v1008
      %v1010 = vrot.slane %v938, %v1009
      %v1012 = vmul.f32 %v942, %v1010
      %v1013 = vmul.f32 %v943, %v1010
      %v1014 = vmul.f32 %v944, %v1010
      %v1015 = vmul.f32 %v945, %v1010
      %v1016 = vmul.f32 %v946, %v1010
      %v1017 = vmul.f32 %v947, %v1010
      %v1018 = vmul.f32 %v948, %v1010
      %v1019 = vmul.f32 %v949, %v1010
      %v1020 = vmul.f32 %v950, %v1010
      %v1021 = vmul.f32 %v951, %v1010
      %v1022 = vmul.f32 %v952, %v1010
      %v1023 = vmul.f32 %v953, %v1010
      %v1024 = vmul.f32 %v954, %v1010
      %v1025 = vmul.f32 %v955, %v1010
      %v1026 = vmul.f32 %v956, %v1010
      %v1027 = vmul.f32 %v957, %v1010
      %v1028 = vmul.f32 %v958, %v1010
      %v1029 = vmul.f32 %v959, %v1010
      %v1030 = vmul.f32 %v960, %v1010
      %v1031 = vmul.f32 %v961, %v1010
      %v1032 = vmul.f32 %v962, %v1010
      %v1033 = vmul.f32 %v963, %v1010
      %v1034 = vmul.f32 %v964, %v1010
      %v1035 = vmul.f32 %v965, %v1010
      %v1036 = vmul.f32 %v966, %v1010
      %v1037 = vmul.f32 %v967, %v1010
      %v1038 = vmul.f32 %v968, %v1010
      %v1039 = vmul.f32 %v969, %v1010
      %v1040 = vmul.f32 %v970, %v1010
      %v1041 = vmul.f32 %v971, %v1010
      %v1042 = vmul.f32 %v972, %v1010
      %v1043 = vmul.f32 %v973, %v1010
      %v1044 = vmul.f32 %v974, %v1010
      %v1045 = vmul.f32 %v975, %v1010
      %v1046 = vmul.f32 %v976, %v1010
      %v1047 = vmul.f32 %v977, %v1010
      %v1048 = vmul.f32 %v978, %v1010
      %v1049 = vmul.f32 %v979, %v1010
      %v1050 = vmul.f32 %v980, %v1010
      %v1051 = vmul.f32 %v981, %v1010
      %v1052 = vmul.f32 %v982, %v1010
      %v1053 = vmul.f32 %v983, %v1010
      %v1054 = vmul.f32 %v984, %v1010
      %v1055 = vmul.f32 %v985, %v1010
      %v1056 = vmul.f32 %v986, %v1010
      %v1057 = vmul.f32 %v987, %v1010
      %v1058 = vmul.f32 %v988, %v1010
      %v1059 = vmul.f32 %v989, %v1010
      %v1060 = vmul.f32 %v990, %v1010
      %v1061 = vmul.f32 %v991, %v1010
      %v1062 = vmul.f32 %v992, %v1010
      %v1063 = vmul.f32 %v993, %v1010
      %v1064 = vmul.f32 %v994, %v1010
      %v1065 = vmul.f32 %v995, %v1010
      %v1066 = vmul.f32 %v996, %v1010
      %v1067 = vmul.f32 %v997, %v1010
      %v1068 = vmul.f32 %v998, %v1010
      %v1069 = vmul.f32 %v999, %v1010
      %v1070 = vmul.f32 %v1000, %v1010
      %v1071 = vmul.f32 %v1001, %v1010
      %v1072 = vmul.f32 %v1002, %v1010
      %v1073 = vmul.f32 %v1003, %v1010
      %v1074 = vmul.f32 %v1004, %v1010
      %v1075 = vmul.f32 %v1005, %v1010
      %v1077 = vlaneseq
      %v1078 = vshrl.u32 %v1077, 7
      %v1079 = vsub.s32 0, %v1078
      %v1080 = vrot.slane %v941, %v1079
      %v1082 = vadd.f32 %v1012, %v1080
      %v1083 = vadd.f32 %v1013, %v1080
      %v1084 = vadd.f32 %v1014, %v1080
      %v1085 = vadd.f32 %v1015, %v1080
      %v1086 = vadd.f32 %v1016, %v1080
      %v1087 = vadd.f32 %v1017, %v1080
      %v1088 = vadd.f32 %v1018, %v1080
      %v1089 = vadd.f32 %v1019, %v1080
      %v1090 = vadd.f32 %v1020, %v1080
      %v1091 = vadd.f32 %v1021, %v1080
      %v1092 = vadd.f32 %v1022, %v1080
      %v1093 = vadd.f32 %v1023, %v1080
      %v1094 = vadd.f32 %v1024, %v1080
      %v1095 = vadd.f32 %v1025, %v1080
      %v1096 = vadd.f32 %v1026, %v1080
      %v1097 = vadd.f32 %v1027, %v1080
      %v1098 = vadd.f32 %v1028, %v1080
      %v1099 = vadd.f32 %v1029, %v1080
      %v1100 = vadd.f32 %v1030, %v1080
      %v1101 = vadd.f32 %v1031, %v1080
      %v1102 = vadd.f32 %v1032, %v1080
      %v1103 = vadd.f32 %v1033, %v1080
      %v1104 = vadd.f32 %v1034, %v1080
      %v1105 = vadd.f32 %v1035, %v1080
      %v1106 = vadd.f32 %v1036, %v1080
      %v1107 = vadd.f32 %v1037, %v1080
      %v1108 = vadd.f32 %v1038, %v1080
      %v1109 = vadd.f32 %v1039, %v1080
      %v1110 = vadd.f32 %v1040, %v1080
      %v1111 = vadd.f32 %v1041, %v1080
      %v1112 = vadd.f32 %v1042, %v1080
      %v1113 = vadd.f32 %v1043, %v1080
      %v1114 = vadd.f32 %v1044, %v1080
      %v1115 = vadd.f32 %v1045, %v1080
      %v1116 = vadd.f32 %v1046, %v1080
      %v1117 = vadd.f32 %v1047, %v1080
      %v1118 = vadd.f32 %v1048, %v1080
      %v1119 = vadd.f32 %v1049, %v1080
      %v1120 = vadd.f32 %v1050, %v1080
      %v1121 = vadd.f32 %v1051, %v1080
      %v1122 = vadd.f32 %v1052, %v1080
      %v1123 = vadd.f32 %v1053, %v1080
      %v1124 = vadd.f32 %v1054, %v1080
      %v1125 = vadd.f32 %v1055, %v1080
      %v1126 = vadd.f32 %v1056, %v1080
      %v1127 = vadd.f32 %v1057, %v1080
      %v1128 = vadd.f32 %v1058, %v1080
      %v1129 = vadd.f32 %v1059, %v1080
      %v1130 = vadd.f32 %v1060, %v1080
      %v1131 = vadd.f32 %v1061, %v1080
      %v1132 = vadd.f32 %v1062, %v1080
      %v1133 = vadd.f32 %v1063, %v1080
      %v1134 = vadd.f32 %v1064, %v1080
      %v1135 = vadd.f32 %v1065, %v1080
      %v1136 = vadd.f32 %v1066, %v1080
      %v1137 = vadd.f32 %v1067, %v1080
      %v1138 = vadd.f32 %v1068, %v1080
      %v1139 = vadd.f32 %v1069, %v1080
      %v1140 = vadd.f32 %v1070, %v1080
      %v1141 = vadd.f32 %v1071, %v1080
      %v1142 = vadd.f32 %v1072, %v1080
      %v1143 = vadd.f32 %v1073, %v1080
      %v1144 = vadd.f32 %v1074, %v1080
      %v1145 = vadd.f32 %v1075, %v1080
      %vm1146 = vcmp.gt.f32.partialorder %v1082, 0.0
      %vm1147 = vcmp.gt.f32.partialorder %v1083, 0.0
      %vm1148 = vcmp.gt.f32.partialorder %v1084, 0.0
      %vm1149 = vcmp.gt.f32.partialorder %v1085, 0.0
      %vm1150 = vcmp.gt.f32.partialorder %v1086, 0.0
      %vm1151 = vcmp.gt.f32.partialorder %v1087, 0.0
      %vm1152 = vcmp.gt.f32.partialorder %v1088, 0.0
      %vm1153 = vcmp.gt.f32.partialorder %v1089, 0.0
      %vm1154 = vcmp.gt.f32.partialorder %v1090, 0.0
      %vm1155 = vcmp.gt.f32.partialorder %v1091, 0.0
      %vm1156 = vcmp.gt.f32.partialorder %v1092, 0.0
      %vm1157 = vcmp.gt.f32.partialorder %v1093, 0.0
      %vm1158 = vcmp.gt.f32.partialorder %v1094, 0.0
      %vm1159 = vcmp.gt.f32.partialorder %v1095, 0.0
      %vm1160 = vcmp.gt.f32.partialorder %v1096, 0.0
      %vm1161 = vcmp.gt.f32.partialorder %v1097, 0.0
      %vm1162 = vcmp.gt.f32.partialorder %v1098, 0.0
      %vm1163 = vcmp.gt.f32.partialorder %v1099, 0.0
      %vm1164 = vcmp.gt.f32.partialorder %v1100, 0.0
      %vm1165 = vcmp.gt.f32.partialorder %v1101, 0.0
      %vm1166 = vcmp.gt.f32.partialorder %v1102, 0.0
      %vm1167 = vcmp.gt.f32.partialorder %v1103, 0.0
      %vm1168 = vcmp.gt.f32.partialorder %v1104, 0.0
      %vm1169 = vcmp.gt.f32.partialorder %v1105, 0.0
      %vm1170 = vcmp.gt.f32.partialorder %v1106, 0.0
      %vm1171 = vcmp.gt.f32.partialorder %v1107, 0.0
      %vm1172 = vcmp.gt.f32.partialorder %v1108, 0.0
      %vm1173 = vcmp.gt.f32.partialorder %v1109, 0.0
      %vm1174 = vcmp.gt.f32.partialorder %v1110, 0.0
      %vm1175 = vcmp.gt.f32.partialorder %v1111, 0.0
      %vm1176 = vcmp.gt.f32.partialorder %v1112, 0.0
      %vm1177 = vcmp.gt.f32.partialorder %v1113, 0.0
      %vm1178 = vcmp.gt.f32.partialorder %v1114, 0.0
      %vm1179 = vcmp.gt.f32.partialorder %v1115, 0.0
      %vm1180 = vcmp.gt.f32.partialorder %v1116, 0.0
      %vm1181 = vcmp.gt.f32.partialorder %v1117, 0.0
      %vm1182 = vcmp.gt.f32.partialorder %v1118, 0.0
      %vm1183 = vcmp.gt.f32.partialorder %v1119, 0.0
      %vm1184 = vcmp.gt.f32.partialorder %v1120, 0.0
      %vm1185 = vcmp.gt.f32.partialorder %v1121, 0.0
      %vm1186 = vcmp.gt.f32.partialorder %v1122, 0.0
      %vm1187 = vcmp.gt.f32.partialorder %v1123, 0.0
      %vm1188 = vcmp.gt.f32.partialorder %v1124, 0.0
      %vm1189 = vcmp.gt.f32.partialorder %v1125, 0.0
      %vm1190 = vcmp.gt.f32.partialorder %v1126, 0.0
      %vm1191 = vcmp.gt.f32.partialorder %v1127, 0.0
      %vm1192 = vcmp.gt.f32.partialorder %v1128, 0.0
      %vm1193 = vcmp.gt.f32.partialorder %v1129, 0.0
      %vm1194 = vcmp.gt.f32.partialorder %v1130, 0.0
      %vm1195 = vcmp.gt.f32.partialorder %v1131, 0.0
      %vm1196 = vcmp.gt.f32.partialorder %v1132, 0.0
      %vm1197 = vcmp.gt.f32.partialorder %v1133, 0.0
      %vm1198 = vcmp.gt.f32.partialorder %v1134, 0.0
      %vm1199 = vcmp.gt.f32.partialorder %v1135, 0.0
      %vm1200 = vcmp.gt.f32.partialorder %v1136, 0.0
      %vm1201 = vcmp.gt.f32.partialorder %v1137, 0.0
      %vm1202 = vcmp.gt.f32.partialorder %v1138, 0.0
      %vm1203 = vcmp.gt.f32.partialorder %v1139, 0.0
      %vm1204 = vcmp.gt.f32.partialorder %v1140, 0.0
      %vm1205 = vcmp.gt.f32.partialorder %v1141, 0.0
      %vm1206 = vcmp.gt.f32.partialorder %v1142, 0.0
      %vm1207 = vcmp.gt.f32.partialorder %v1143, 0.0
      %vm1208 = vcmp.gt.f32.partialorder %v1144, 0.0
      %vm1209 = vcmp.gt.f32.partialorder %v1145, 0.0
      %v1210 = vmul.f32 %v1082, 0.01
      %v1211 = vmul.f32 %v1083, 0.01
      %v1212 = vmul.f32 %v1084, 0.01
      %v1213 = vmul.f32 %v1085, 0.01
      %v1214 = vmul.f32 %v1086, 0.01
      %v1215 = vmul.f32 %v1087, 0.01
      %v1216 = vmul.f32 %v1088, 0.01
      %v1217 = vmul.f32 %v1089, 0.01
      %v1218 = vmul.f32 %v1090, 0.01
      %v1219 = vmul.f32 %v1091, 0.01
      %v1220 = vmul.f32 %v1092, 0.01
      %v1221 = vmul.f32 %v1093, 0.01
      %v1222 = vmul.f32 %v1094, 0.01
      %v1223 = vmul.f32 %v1095, 0.01
      %v1224 = vmul.f32 %v1096, 0.01
      %v1225 = vmul.f32 %v1097, 0.01
      %v1226 = vmul.f32 %v1098, 0.01
      %v1227 = vmul.f32 %v1099, 0.01
      %v1228 = vmul.f32 %v1100, 0.01
      %v1229 = vmul.f32 %v1101, 0.01
      %v1230 = vmul.f32 %v1102, 0.01
      %v1231 = vmul.f32 %v1103, 0.01
      %v1232 = vmul.f32 %v1104, 0.01
      %v1233 = vmul.f32 %v1105, 0.01
      %v1234 = vmul.f32 %v1106, 0.01
      %v1235 = vmul.f32 %v1107, 0.01
      %v1236 = vmul.f32 %v1108, 0.01
      %v1237 = vmul.f32 %v1109, 0.01
      %v1238 = vmul.f32 %v1110, 0.01
      %v1239 = vmul.f32 %v1111, 0.01
      %v1240 = vmul.f32 %v1112, 0.01
      %v1241 = vmul.f32 %v1113, 0.01
      %v1242 = vmul.f32 %v1114, 0.01
      %v1243 = vmul.f32 %v1115, 0.01
      %v1244 = vmul.f32 %v1116, 0.01
      %v1245 = vmul.f32 %v1117, 0.01
      %v1246 = vmul.f32 %v1118, 0.01
      %v1247 = vmul.f32 %v1119, 0.01
      %v1248 = vmul.f32 %v1120, 0.01
      %v1249 = vmul.f32 %v1121, 0.01
      %v1250 = vmul.f32 %v1122, 0.01
      %v1251 = vmul.f32 %v1123, 0.01
      %v1252 = vmul.f32 %v1124, 0.01
      %v1253 = vmul.f32 %v1125, 0.01
      %v1254 = vmul.f32 %v1126, 0.01
      %v1255 = vmul.f32 %v1127, 0.01
      %v1256 = vmul.f32 %v1128, 0.01
      %v1257 = vmul.f32 %v1129, 0.01
      %v1258 = vmul.f32 %v1130, 0.01
      %v1259 = vmul.f32 %v1131, 0.01
      %v1260 = vmul.f32 %v1132, 0.01
      %v1261 = vmul.f32 %v1133, 0.01
      %v1262 = vmul.f32 %v1134, 0.01
      %v1263 = vmul.f32 %v1135, 0.01
      %v1264 = vmul.f32 %v1136, 0.01
      %v1265 = vmul.f32 %v1137, 0.01
      %v1266 = vmul.f32 %v1138, 0.01
      %v1267 = vmul.f32 %v1139, 0.01
      %v1268 = vmul.f32 %v1140, 0.01
      %v1269 = vmul.f32 %v1141, 0.01
      %v1270 = vmul.f32 %v1142, 0.01
      %v1271 = vmul.f32 %v1143, 0.01
      %v1272 = vmul.f32 %v1144, 0.01
      %v1273 = vmul.f32 %v1145, 0.01
      %v1274 = vsel %vm1146, %v1082, %v1210
      %v1275 = vsel %vm1147, %v1083, %v1211
      %v1276 = vsel %vm1148, %v1084, %v1212
      %v1277 = vsel %vm1149, %v1085, %v1213
      %v1278 = vsel %vm1150, %v1086, %v1214
      %v1279 = vsel %vm1151, %v1087, %v1215
      %v1280 = vsel %vm1152, %v1088, %v1216
      %v1281 = vsel %vm1153, %v1089, %v1217
      %v1282 = vsel %vm1154, %v1090, %v1218
      %v1283 = vsel %vm1155, %v1091, %v1219
      %v1284 = vsel %vm1156, %v1092, %v1220
      %v1285 = vsel %vm1157, %v1093, %v1221
      %v1286 = vsel %vm1158, %v1094, %v1222
      %v1287 = vsel %vm1159, %v1095, %v1223
      %v1288 = vsel %vm1160, %v1096, %v1224
      %v1289 = vsel %vm1161, %v1097, %v1225
      %v1290 = vsel %vm1162, %v1098, %v1226
      %v1291 = vsel %vm1163, %v1099, %v1227
      %v1292 = vsel %vm1164, %v1100, %v1228
      %v1293 = vsel %vm1165, %v1101, %v1229
      %v1294 = vsel %vm1166, %v1102, %v1230
      %v1295 = vsel %vm1167, %v1103, %v1231
      %v1296 = vsel %vm1168, %v1104, %v1232
      %v1297 = vsel %vm1169, %v1105, %v1233
      %v1298 = vsel %vm1170, %v1106, %v1234
      %v1299 = vsel %vm1171, %v1107, %v1235
      %v1300 = vsel %vm1172, %v1108, %v1236
      %v1301 = vsel %vm1173, %v1109, %v1237
      %v1302 = vsel %vm1174, %v1110, %v1238
      %v1303 = vsel %vm1175, %v1111, %v1239
      %v1304 = vsel %vm1176, %v1112, %v1240
      %v1305 = vsel %vm1177, %v1113, %v1241
      %v1306 = vsel %vm1178, %v1114, %v1242
      %v1307 = vsel %vm1179, %v1115, %v1243
      %v1308 = vsel %vm1180, %v1116, %v1244
      %v1309 = vsel %vm1181, %v1117, %v1245
      %v1310 = vsel %vm1182, %v1118, %v1246
      %v1311 = vsel %vm1183, %v1119, %v1247
      %v1312 = vsel %vm1184, %v1120, %v1248
      %v1313 = vsel %vm1185, %v1121, %v1249
      %v1314 = vsel %vm1186, %v1122, %v1250
      %v1315 = vsel %vm1187, %v1123, %v1251
      %v1316 = vsel %vm1188, %v1124, %v1252
      %v1317 = vsel %vm1189, %v1125, %v1253
      %v1318 = vsel %vm1190, %v1126, %v1254
      %v1319 = vsel %vm1191, %v1127, %v1255
      %v1320 = vsel %vm1192, %v1128, %v1256
      %v1321 = vsel %vm1193, %v1129, %v1257
      %v1322 = vsel %vm1194, %v1130, %v1258
      %v1323 = vsel %vm1195, %v1131, %v1259
      %v1324 = vsel %vm1196, %v1132, %v1260
      %v1325 = vsel %vm1197, %v1133, %v1261
      %v1326 = vsel %vm1198, %v1134, %v1262
      %v1327 = vsel %vm1199, %v1135, %v1263
      %v1328 = vsel %vm1200, %v1136, %v1264
      %v1329 = vsel %vm1201, %v1137, %v1265
      %v1330 = vsel %vm1202, %v1138, %v1266
      %v1331 = vsel %vm1203, %v1139, %v1267
      %v1332 = vsel %vm1204, %v1140, %v1268
      %v1333 = vsel %vm1205, %v1141, %v1269
      %v1334 = vsel %vm1206, %v1142, %v1270
      %v1335 = vsel %vm1207, %v1143, %v1271
      %v1336 = vsel %vm1208, %v1144, %v1272
      %v1337 = vsel %vm1209, %v1145, %v1273
      %v1338 = vpack.c.bf16 %v1275, %v1274
      %v1339 = vpack.c.bf16 %v1277, %v1276
      %v1340 = vpack.c.bf16 %v1279, %v1278
      %v1341 = vpack.c.bf16 %v1281, %v1280
      %v1342 = vpack.c.bf16 %v1283, %v1282
      %v1343 = vpack.c.bf16 %v1285, %v1284
      %v1344 = vpack.c.bf16 %v1287, %v1286
      %v1345 = vpack.c.bf16 %v1289, %v1288
      %v1346 = vpack.c.bf16 %v1291, %v1290
      %v1347 = vpack.c.bf16 %v1293, %v1292
      %v1348 = vpack.c.bf16 %v1295, %v1294
      %v1349 = vpack.c.bf16 %v1297, %v1296
      %v1350 = vpack.c.bf16 %v1299, %v1298
      %v1351 = vpack.c.bf16 %v1301, %v1300
      %v1352 = vpack.c.bf16 %v1303, %v1302
      %v1353 = vpack.c.bf16 %v1305, %v1304
      %v1354 = vpack.c.bf16 %v1307, %v1306
      %v1355 = vpack.c.bf16 %v1309, %v1308
      %v1356 = vpack.c.bf16 %v1311, %v1310
      %v1357 = vpack.c.bf16 %v1313, %v1312
      %v1358 = vpack.c.bf16 %v1315, %v1314
      %v1359 = vpack.c.bf16 %v1317, %v1316
      %v1360 = vpack.c.bf16 %v1319, %v1318
      %v1361 = vpack.c.bf16 %v1321, %v1320
      %v1362 = vpack.c.bf16 %v1323, %v1322
      %v1363 = vpack.c.bf16 %v1325, %v1324
      %v1364 = vpack.c.bf16 %v1327, %v1326
      %v1365 = vpack.c.bf16 %v1329, %v1328
      %v1366 = vpack.c.bf16 %v1331, %v1330
      %v1367 = vpack.c.bf16 %v1333, %v1332
      %v1368 = vpack.c.bf16 %v1335, %v1334
      %v1369 = vpack.c.bf16 %v1337, %v1336
      %v1402 = vunpack.c.l.b16 %v1338
      %v1403 = vunpack.c.h.b16 %v1338
      %v1404 = vunpack.c.l.b16 %v1339
      %v1405 = vunpack.c.h.b16 %v1339
      %v1406 = vunpack.c.l.b16 %v1340
      %v1407 = vunpack.c.h.b16 %v1340
      %v1408 = vunpack.c.l.b16 %v1341
      %v1409 = vunpack.c.h.b16 %v1341
      %v1410 = vunpack.c.l.b16 %v1342
      %v1411 = vunpack.c.h.b16 %v1342
      %v1412 = vunpack.c.l.b16 %v1343
      %v1413 = vunpack.c.h.b16 %v1343
      %v1414 = vunpack.c.l.b16 %v1344
      %v1415 = vunpack.c.h.b16 %v1344
      %v1416 = vunpack.c.l.b16 %v1345
      %v1417 = vunpack.c.h.b16 %v1345
      %v1418 = vunpack.c.l.b16 %v1346
      %v1419 = vunpack.c.h.b16 %v1346
      %v1420 = vunpack.c.l.b16 %v1347
      %v1421 = vunpack.c.h.b16 %v1347
      %v1422 = vunpack.c.l.b16 %v1348
      %v1423 = vunpack.c.h.b16 %v1348
      %v1424 = vunpack.c.l.b16 %v1349
      %v1425 = vunpack.c.h.b16 %v1349
      %v1426 = vunpack.c.l.b16 %v1350
      %v1427 = vunpack.c.h.b16 %v1350
      %v1428 = vunpack.c.l.b16 %v1351
      %v1429 = vunpack.c.h.b16 %v1351
      %v1430 = vunpack.c.l.b16 %v1352
      %v1431 = vunpack.c.h.b16 %v1352
      %v1432 = vunpack.c.l.b16 %v1353
      %v1433 = vunpack.c.h.b16 %v1353
      %v1434 = vunpack.c.l.b16 %v1354
      %v1435 = vunpack.c.h.b16 %v1354
      %v1436 = vunpack.c.l.b16 %v1355
      %v1437 = vunpack.c.h.b16 %v1355
      %v1438 = vunpack.c.l.b16 %v1356
      %v1439 = vunpack.c.h.b16 %v1356
      %v1440 = vunpack.c.l.b16 %v1357
      %v1441 = vunpack.c.h.b16 %v1357
      %v1442 = vunpack.c.l.b16 %v1358
      %v1443 = vunpack.c.h.b16 %v1358
      %v1444 = vunpack.c.l.b16 %v1359
      %v1445 = vunpack.c.h.b16 %v1359
      %v1446 = vunpack.c.l.b16 %v1360
      %v1447 = vunpack.c.h.b16 %v1360
      %v1448 = vunpack.c.l.b16 %v1361
      %v1449 = vunpack.c.h.b16 %v1361
      %v1450 = vunpack.c.l.b16 %v1362
      %v1451 = vunpack.c.h.b16 %v1362
      %v1452 = vunpack.c.l.b16 %v1363
      %v1453 = vunpack.c.h.b16 %v1363
      %v1454 = vunpack.c.l.b16 %v1364
      %v1455 = vunpack.c.h.b16 %v1364
      %v1456 = vunpack.c.l.b16 %v1365
      %v1457 = vunpack.c.h.b16 %v1365
      %v1458 = vunpack.c.l.b16 %v1366
      %v1459 = vunpack.c.h.b16 %v1366
      %v1460 = vunpack.c.l.b16 %v1367
      %v1461 = vunpack.c.h.b16 %v1367
      %v1462 = vunpack.c.l.b16 %v1368
      %v1463 = vunpack.c.h.b16 %v1368
      %v1464 = vunpack.c.l.b16 %v1369
      %v1465 = vunpack.c.h.b16 %v1369
      %v1466 = vpack.c.b16 %v1402, %v1402
      %v1467 = vpack.c.b16 %v1403, %v1403
      %v1468 = vpack.c.b16 %v1404, %v1404
      %v1469 = vpack.c.b16 %v1405, %v1405
      %v1470 = vpack.c.b16 %v1406, %v1406
      %v1471 = vpack.c.b16 %v1407, %v1407
      %v1472 = vpack.c.b16 %v1408, %v1408
      %v1473 = vpack.c.b16 %v1409, %v1409
      %v1474 = vpack.c.b16 %v1410, %v1410
      %v1475 = vpack.c.b16 %v1411, %v1411
      %v1476 = vpack.c.b16 %v1412, %v1412
      %v1477 = vpack.c.b16 %v1413, %v1413
      %v1478 = vpack.c.b16 %v1414, %v1414
      %v1479 = vpack.c.b16 %v1415, %v1415
      %v1480 = vpack.c.b16 %v1416, %v1416
      %v1481 = vpack.c.b16 %v1417, %v1417
      %v1482 = vpack.c.b16 %v1418, %v1418
      %v1483 = vpack.c.b16 %v1419, %v1419
      %v1484 = vpack.c.b16 %v1420, %v1420
      %v1485 = vpack.c.b16 %v1421, %v1421
      %v1486 = vpack.c.b16 %v1422, %v1422
      %v1487 = vpack.c.b16 %v1423, %v1423
      %v1488 = vpack.c.b16 %v1424, %v1424
      %v1489 = vpack.c.b16 %v1425, %v1425
      %v1490 = vpack.c.b16 %v1426, %v1426
      %v1491 = vpack.c.b16 %v1427, %v1427
      %v1492 = vpack.c.b16 %v1428, %v1428
      %v1493 = vpack.c.b16 %v1429, %v1429
      %v1494 = vpack.c.b16 %v1430, %v1430
      %v1495 = vpack.c.b16 %v1431, %v1431
      %v1496 = vpack.c.b16 %v1432, %v1432
      %v1497 = vpack.c.b16 %v1433, %v1433
      %v1498 = vpack.c.b16 %v1434, %v1434
      %v1499 = vpack.c.b16 %v1435, %v1435
      %v1500 = vpack.c.b16 %v1436, %v1436
      %v1501 = vpack.c.b16 %v1437, %v1437
      %v1502 = vpack.c.b16 %v1438, %v1438
      %v1503 = vpack.c.b16 %v1439, %v1439
      %v1504 = vpack.c.b16 %v1440, %v1440
      %v1505 = vpack.c.b16 %v1441, %v1441
      %v1506 = vpack.c.b16 %v1442, %v1442
      %v1507 = vpack.c.b16 %v1443, %v1443
      %v1508 = vpack.c.b16 %v1444, %v1444
      %v1509 = vpack.c.b16 %v1445, %v1445
      %v1510 = vpack.c.b16 %v1446, %v1446
      %v1511 = vpack.c.b16 %v1447, %v1447
      %v1512 = vpack.c.b16 %v1448, %v1448
      %v1513 = vpack.c.b16 %v1449, %v1449
      %v1514 = vpack.c.b16 %v1450, %v1450
      %v1515 = vpack.c.b16 %v1451, %v1451
      %v1516 = vpack.c.b16 %v1452, %v1452
      %v1517 = vpack.c.b16 %v1453, %v1453
      %v1518 = vpack.c.b16 %v1454, %v1454
      %v1519 = vpack.c.b16 %v1455, %v1455
      %v1520 = vpack.c.b16 %v1456, %v1456
      %v1521 = vpack.c.b16 %v1457, %v1457
      %v1522 = vpack.c.b16 %v1458, %v1458
      %v1523 = vpack.c.b16 %v1459, %v1459
      %v1524 = vpack.c.b16 %v1460, %v1460
      %v1525 = vpack.c.b16 %v1461, %v1461
      %v1526 = vpack.c.b16 %v1462, %v1462
      %v1527 = vpack.c.b16 %v1463, %v1463
      %v1528 = vpack.c.b16 %v1464, %v1464
      %v1529 = vpack.c.b16 %v1465, %v1465
      %1594 = vst [vmem:[#allocation5] sm:$0xf] %v1466
      %1595 = vst [vmem:[#allocation5 + $0x4] sm:$0xf] %v1467
      %1596 = vst [vmem:[#allocation5 + $0x8] sm:$0xf] %v1468
      %1597 = vst [vmem:[#allocation5 + $0xc] sm:$0xf] %v1469
      %1598 = vst [vmem:[#allocation5 + $0x10] sm:$0xf] %v1470
      %1599 = vst [vmem:[#allocation5 + $0x14] sm:$0xf] %v1471
      %1600 = vst [vmem:[#allocation5 + $0x18] sm:$0xf] %v1472
      %1601 = vst [vmem:[#allocation5 + $0x1c] sm:$0xf] %v1473
      %1602 = vst [vmem:[#allocation5 + $0x20] sm:$0xf] %v1474
      %1603 = vst [vmem:[#allocation5 + $0x24] sm:$0xf] %v1475
      %1604 = vst [vmem:[#allocation5 + $0x28] sm:$0xf] %v1476
      %1605 = vst [vmem:[#allocation5 + $0x2c] sm:$0xf] %v1477
      %1606 = vst [vmem:[#allocation5 + $0x30] sm:$0xf] %v1478
      %1607 = vst [vmem:[#allocation5 + $0x34] sm:$0xf] %v1479
      %1608 = vst [vmem:[#allocation5 + $0x38] sm:$0xf] %v1480
      %1609 = vst [vmem:[#allocation5 + $0x3c] sm:$0xf] %v1481
      %1610 = vst [vmem:[#allocation5 + $0x40] sm:$0xf] %v1482
      %1611 = vst [vmem:[#allocation5 + $0x44] sm:$0xf] %v1483
      %1612 = vst [vmem:[#allocation5 + $0x48] sm:$0xf] %v1484
      %1613 = vst [vmem:[#allocation5 + $0x4c] sm:$0xf] %v1485
      %1614 = vst [vmem:[#allocation5 + $0x50] sm:$0xf] %v1486
      %1615 = vst [vmem:[#allocation5 + $0x54] sm:$0xf] %v1487
      %1616 = vst [vmem:[#allocation5 + $0x58] sm:$0xf] %v1488
      %1617 = vst [vmem:[#allocation5 + $0x5c] sm:$0xf] %v1489
      %1618 = vst [vmem:[#allocation5 + $0x60] sm:$0xf] %v1490
      %1619 = vst [vmem:[#allocation5 + $0x64] sm:$0xf] %v1491
      %1620 = vst [vmem:[#allocation5 + $0x68] sm:$0xf] %v1492
      %1621 = vst [vmem:[#allocation5 + $0x6c] sm:$0xf] %v1493
      %1622 = vst [vmem:[#allocation5 + $0x70] sm:$0xf] %v1494
      %1623 = vst [vmem:[#allocation5 + $0x74] sm:$0xf] %v1495
      %1624 = vst [vmem:[#allocation5 + $0x78] sm:$0xf] %v1496
      %1625 = vst [vmem:[#allocation5 + $0x7c] sm:$0xf] %v1497
      %1626 = vst [vmem:[#allocation5 + $0x80] sm:$0xf] %v1498
      %1627 = vst [vmem:[#allocation5 + $0x84] sm:$0xf] %v1499
      %1628 = vst [vmem:[#allocation5 + $0x88] sm:$0xf] %v1500
      %1629 = vst [vmem:[#allocation5 + $0x8c] sm:$0xf] %v1501
      %1630 = vst [vmem:[#allocation5 + $0x90] sm:$0xf] %v1502
      %1631 = vst [vmem:[#allocation5 + $0x94] sm:$0xf] %v1503
      %1632 = vst [vmem:[#allocation5 + $0x98] sm:$0xf] %v1504
      %1633 = vst [vmem:[#allocation5 + $0x9c] sm:$0xf] %v1505
      %1634 = vst [vmem:[#allocation5 + $0xa0] sm:$0xf] %v1506
      %1635 = vst [vmem:[#allocation5 + $0xa4] sm:$0xf] %v1507
      %1636 = vst [vmem:[#allocation5 + $0xa8] sm:$0xf] %v1508
      %1637 = vst [vmem:[#allocation5 + $0xac] sm:$0xf] %v1509
      %1638 = vst [vmem:[#allocation5 + $0xb0] sm:$0xf] %v1510
      %1639 = vst [vmem:[#allocation5 + $0xb4] sm:$0xf] %v1511
      %1640 = vst [vmem:[#allocation5 + $0xb8] sm:$0xf] %v1512
      %1641 = vst [vmem:[#allocation5 + $0xbc] sm:$0xf] %v1513
      %1642 = vst [vmem:[#allocation5 + $0xc0] sm:$0xf] %v1514
      %1643 = vst [vmem:[#allocation5 + $0xc4] sm:$0xf] %v1515
      %1644 = vst [vmem:[#allocation5 + $0xc8] sm:$0xf] %v1516
      %1645 = vst [vmem:[#allocation5 + $0xcc] sm:$0xf] %v1517
      %1646 = vst [vmem:[#allocation5 + $0xd0] sm:$0xf] %v1518
      %1647 = vst [vmem:[#allocation5 + $0xd4] sm:$0xf] %v1519
      %1648 = vst [vmem:[#allocation5 + $0xd8] sm:$0xf] %v1520
      %1649 = vst [vmem:[#allocation5 + $0xdc] sm:$0xf] %v1521
      %1650 = vst [vmem:[#allocation5 + $0xe0] sm:$0xf] %v1522
      %1651 = vst [vmem:[#allocation5 + $0xe4] sm:$0xf] %v1523
      %1652 = vst [vmem:[#allocation5 + $0xe8] sm:$0xf] %v1524
      %1653 = vst [vmem:[#allocation5 + $0xec] sm:$0xf] %v1525
      %1654 = vst [vmem:[#allocation5 + $0xf0] sm:$0xf] %v1526
      %1655 = vst [vmem:[#allocation5 + $0xf4] sm:$0xf] %v1527
      %1656 = vst [vmem:[#allocation5 + $0xf8] sm:$0xf] %v1528
      %1657 = vst [vmem:[#allocation5 + $0xfc] sm:$0xf] %v1529
    $region25: #{tpu_custom_call.1} parent=1 // pred_fallthru
      _
    // Predicated region
    $region26: #{tpu_custom_call.1} parent=1 // pred_check
      _
    $region27: #{tpu_custom_call.1} parent=1 // pred_check_branch
      %1659 = sbr.rel (0) target = $region29
    $region28: #{tpu_custom_call.1} parent=1 // pred_region
      %s1661 = ssub.s32 4096, 4096
      %1662 = vsyncadd [#allocation6], %s1661
      %s1663 = sshll.u32 [#allocation5], 4
      %s1664 = int_to_ptr.vmem [resolvable:$true] %s1663
      %1669 = dma.vmem_to_hbm [thread:$0]  %s1664, 4096, %s4, [#allocation6], 64, 64, 4
    $region29: #{tpu_custom_call.1} parent=1 // pred_fallthru
      _
    // Predicated region
    $region30: #{tpu_custom_call.1} parent=1 // pred_check
      _
    $region31: #{tpu_custom_call.1} parent=1 // pred_check_branch
      %1671 = sbr.rel (0) target = $region33
    $region32: #{tpu_custom_call.1} parent=1 // pred_region
      %1672 = dma.done [#allocation6], 4096
    $region33: #{tpu_custom_call.1} parent=1 // pred_fallthru
      _
    %1673 = vsyncpa [#allocation6], 1

</llo_original>
